<compile_context>
chip_gen: v6e
topology: v6e:2x2x1
jax: 0.10.0
libtpu: 0.0.40
codegen_flags: <defaults>
</compile_context>

<pallas_src>
import math

import jax
import jax.numpy as jnp
from jax.experimental import pallas as pl
from jax.experimental.pallas import tpu as pltpu

# ---------------- configuration (small, deterministic) ----------------
EMB_DIM = 32
N_HEADS = 4
HEAD_DIM = EMB_DIM // N_HEADS
FF_DIM = 4 * EMB_DIM
BATCH = 2
SEQ = 8        # target (decoder) sequence length
SEQ_ENC = 8    # encoder sequence length
SCALE = math.sqrt(HEAD_DIM)
LN_EPS = 1e-5

ROWS = BATCH * SEQ               # 16 rows in the folded (batch*seq, emb) slab
STACK = BATCH * N_HEADS * SEQ    # 64 rows in the head-stacked attention slab
assert SEQ == SEQ_ENC and (SEQ & (SEQ - 1)) == 0
_BLK_SHIFT = SEQ.bit_length() - 1   # log2(block size) for the block-diagonal mask

# Row indices of the packed (16, FF_DIM) bias / LayerNorm slab.
# Rows 0..14 use lanes [0:EMB_DIM]; row R_BF1 spans all FF_DIM lanes.
(R_BQ1, R_BK1, R_BV1, R_BO1,
 R_BQ2, R_BK2, R_BV2, R_BO2,
 R_BF2, R_G1, R_BE1, R_G2, R_BE2, R_G3, R_BE3, R_BF1) = range(16)

# Lane offsets inside the packed (EMB_DIM, 512) weight slab.
C_QKV1 = 0                      # (32, 96)  [wq1*inv_scale | wk1 | wv1]
C_WO1 = 96                      # (32, 32)
C_WQ2 = 128                     # (32, 32)  wq2*inv_scale
C_KV2 = 160                     # (32, 64)  [wk2 | wv2]
C_WO2 = 224                     # (32, 32)
C_WF1 = 256                     # (32, 128)
C_WF2T = 384                    # (32, 128) wf2 stored transposed
W_COLS = 512


# ---------------- in-kernel helpers ----------------
def _layernorm(h, g, b):
    mu = jnp.mean(h, axis=-1, keepdims=True)
    var = jnp.mean((h - mu) ** 2, axis=-1, keepdims=True)
    return (h - mu) * jax.lax.rsqrt(var + LN_EPS) * g + b


# ---------------- the kernel ----------------
def decoder_layer_kernel(x_ref, enc_ref, w_ref, vecs_ref, out_ref):
    E, HD, H = EMB_DIM, HEAD_DIM, N_HEADS
    x = x_ref[...]        # (16, 32)  float32, batch folded into rows
    enc = enc_ref[...]    # (16, 32)
    W = w_ref[...]        # (32, 512) packed weight slab
    V = vecs_ref[...]     # (16, 128) packed biases / LayerNorm params / bf1

    def row(i):
        return V[i:i + 1, 0:E]            # (1, E), broadcasts over rows

    # Block-diagonal additive mask shared by both attentions (SEQ == SEQ_ENC).
    # Rows/cols of the head-stacked (64, 64) score matrix are grouped in blocks
    # of SEQ; only same-(head, batch) blocks survive the softmax.
    r_grp = jnp.right_shift(
        jax.lax.broadcasted_iota(jnp.int32, (STACK, STACK), 0), _BLK_SHIFT)
    c_grp = jnp.right_shift(
        jax.lax.broadcasted_iota(jnp.int32, (STACK, STACK), 1), _BLK_SHIFT)
    mask = jnp.where(r_grp == c_grp, jnp.float32(0.0), jnp.float32(-1e9))

    def stack_heads(t):
        # (16, E) heads-on-lanes -> (64, HD), rows ordered (head, batch, seq)
        return jnp.concatenate([t[:, h * HD:(h + 1) * HD] for h in range(H)], axis=0)

    def unstack_heads(t):
        # (64, HD) -> (16, E) heads back on lanes
        return jnp.concatenate([t[h * ROWS:(h + 1) * ROWS, :] for h in range(H)], axis=1)

    def attend(q, k, v, wo):
        # q, k, v: (16, E); q already pre-scaled by 1/sqrt(head_dim).
        qs, ks, vs = stack_heads(q), stack_heads(k), stack_heads(v)      # (64, 8)
        s = jnp.dot(qs, ks.T, preferred_element_type=jnp.float32) + mask  # (64, 64)
        s = s - jnp.max(s, axis=-1, keepdims=True)
        p = jnp.exp(s)
        p = p / jnp.sum(p, axis=-1, keepdims=True)   # exact divide: kernel isn't VPU-bound
        pv = jnp.dot(p, vs, preferred_element_type=jnp.float32)           # (64, 8)
        return jnp.dot(unstack_heads(pv), wo, preferred_element_type=jnp.float32)

    # ---- self attention (fused QKV projection, Q pre-scaled) ----
    qkv = jnp.dot(x, W[:, C_QKV1:C_QKV1 + 3 * E], preferred_element_type=jnp.float32)
    q1 = qkv[:, 0:E] + row(R_BQ1)
    k1 = qkv[:, E:2 * E] + row(R_BK1)
    v1 = qkv[:, 2 * E:3 * E] + row(R_BV1)
    a1 = attend(q1, k1, v1, W[:, C_WO1:C_WO1 + E]) + row(R_BO1)
    x1 = _layernorm(x + a1, row(R_G1), row(R_BE1))

    # ---- encoder-decoder attention (fused KV projection) ----
    q2 = jnp.dot(x1, W[:, C_WQ2:C_WQ2 + E], preferred_element_type=jnp.float32) + row(R_BQ2)
    kv2 = jnp.dot(enc, W[:, C_KV2:C_KV2 + 2 * E], preferred_element_type=jnp.float32)
    k2 = kv2[:, 0:E] + row(R_BK2)
    v2 = kv2[:, E:2 * E] + row(R_BV2)
    a2 = attend(q2, k2, v2, W[:, C_WO2:C_WO2 + E]) + row(R_BO2)
    x2 = _layernorm(x1 + a2, row(R_G2), row(R_BE2))

    # ---- feed forward ----
    h = jnp.dot(x2, W[:, C_WF1:C_WF1 + FF_DIM],
                preferred_element_type=jnp.float32) + V[R_BF1:R_BF1 + 1, :]
    h = jnp.maximum(h, 0.0)
    ff = jnp.dot(h, W[:, C_WF2T:C_WF2T + FF_DIM].T,
                 preferred_element_type=jnp.float32) + row(R_BF2)
    out_ref[...] = _layernorm(x2 + ff, row(R_G3), row(R_BE3)).astype(out_ref.dtype)


# ---------------- one-time parameter packing (NOT in the forward path) ----------------
def pack_params(p):
    inv = jnp.float32(1.0 / SCALE)
    w = jnp.concatenate([
        p["wq1"] * inv, p["wk1"], p["wv1"],   # C_QKV1
        p["wo1"],                             # C_WO1
        p["wq2"] * inv,                       # C_WQ2
        p["wk2"], p["wv2"],                   # C_KV2
        p["wo2"],                             # C_WO2
        p["wf1"],                             # C_WF1
        p["wf2"].T,                           # C_WF2T (stored transposed)
    ], axis=1).astype(jnp.float32)
    assert w.shape == (EMB_DIM, W_COLS)

    vec_rows = jnp.concatenate([
        p["bq1"] * inv, p["bk1"], p["bv1"], p["bo1"],
        p["bq2"] * inv, p["bk2"], p["bv2"], p["bo2"],
        p["bf2"],
        p["g1"], p["be1"], p["g2"], p["be2"], p["g3"], p["be3"],
    ], axis=0).astype(jnp.float32)            # (15, EMB_DIM)
    vecs = jnp.zeros((16, FF_DIM), jnp.float32)
    vecs = vecs.at[0:15, 0:EMB_DIM].set(vec_rows)
    vecs = vecs.at[R_BF1:R_BF1 + 1, :].set(p["bf1"].astype(jnp.float32))
    return {"w": w, "vecs": vecs}


# ---------------- wrapper ----------------
_COST = pl.CostEstimate(flops=780_000, transcendentals=8_300, bytes_accessed=80_000)


def decoder_layer(x, enc_output, packed):
    B, S, E = x.shape
    _, Se, _ = enc_output.shape
    assert (B, S, E) == (BATCH, SEQ, EMB_DIM) and Se == SEQ_ENC

    # Fold batch into the row axis -> single kernel invocation, no grid.
    x2d = x.reshape(B * S, E)
    enc2d = enc_output.reshape(B * Se, E)

    out2d = pl.pallas_call(
        decoder_layer_kernel,
        out_shape=jax.ShapeDtypeStruct((B * S, E), jnp.float32),
        in_specs=[pl.BlockSpec(memory_space=pltpu.MemorySpace.VMEM)] * 4,
        out_specs=pl.BlockSpec(memory_space=pltpu.MemorySpace.VMEM),
        cost_estimate=_COST,
    )(x2d, enc2d, packed["w"], packed["vecs"])

    return out2d.reshape(B, S, E)


# ---------------- pure-JAX reference (for correctness check) ----------------
def _ref_mha(q_in, kv_in, wq, wk, wv, wo, bq, bk, bv, bo):
    q = q_in @ wq + bq
    k = kv_in @ wk + bk
    v = kv_in @ wv + bv
    B, Sq, _ = q.shape
    Sk = k.shape[1]
    qh = q.reshape(B, Sq, N_HEADS, HEAD_DIM).transpose(0, 2, 1, 3)
    kh = k.reshape(B, Sk, N_HEADS, HEAD_DIM).transpose(0, 2, 1, 3)
    vh = v.reshape(B, Sk, N_HEADS, HEAD_DIM).transpose(0, 2, 1, 3)
    scores = jnp.einsum("bhqd,bhkd->bhqk", qh, kh) / SCALE
    p = jax.nn.softmax(scores, axis=-1)
    o = jnp.einsum("bhqk,bhkd->bhqd", p, vh)
    o = o.transpose(0, 2, 1, 3).reshape(B, Sq, EMB_DIM)
    return o @ wo + bo


def _ref_ln(h, g, b):
    mu = jnp.mean(h, axis=-1, keepdims=True)
    var = jnp.mean((h - mu) ** 2, axis=-1, keepdims=True)
    return (h - mu) * jax.lax.rsqrt(var + LN_EPS) * g + b


def decoder_layer_ref(x, enc, p):
    a1 = _ref_mha(x, x, p["wq1"], p["wk1"], p["wv1"], p["wo1"],
                  p["bq1"], p["bk1"], p["bv1"], p["bo1"])
    x1 = _ref_ln(x + a1, p["g1"], p["be1"])
    a2 = _ref_mha(x1, enc, p["wq2"], p["wk2"], p["wv2"], p["wo2"],
                  p["bq2"], p["bk2"], p["bv2"], p["bo2"])
    x2 = _ref_ln(x1 + a2, p["g2"], p["be2"])
    h = jnp.maximum(x2 @ p["wf1"] + p["bf1"], 0.0)
    ff = h @ p["wf2"] + p["bf2"]
    return _ref_ln(x2 + ff, p["g3"], p["be3"])


# ---------------- deterministic parameter init ----------------
def make_params(key):
    ks = jax.random.split(key, 32)
    it = iter(ks)
    scale = 0.1

    def mat(shape):
        return scale * jax.random.normal(next(it), shape, dtype=jnp.float32)

    p = {}
    for pre in ("1", "2"):  # self-attn, cross-attn
        for w in ("wq", "wk", "wv", "wo"):
            p[w + pre] = mat((EMB_DIM, EMB_DIM))        # stored as (in, out)
        for b in ("bq", "bk", "bv", "bo"):
            p[b + pre] = mat((1, EMB_DIM))
    for i in ("1", "2", "3"):
        p["g" + i] = 1.0 + mat((1, EMB_DIM))            # LayerNorm gamma
        p["be" + i] = mat((1, EMB_DIM))                 # LayerNorm beta
    p["wf1"] = mat((EMB_DIM, FF_DIM))
    p["bf1"] = mat((1, FF_DIM))
    p["wf2"] = mat((FF_DIM, EMB_DIM))
    p["bf2"] = mat((1, EMB_DIM))
    return p


if __name__ == "__main__":
    key = jax.random.PRNGKey(0)
    k_x, k_enc, k_p = jax.random.split(key, 3)
    x = jax.random.normal(k_x, (BATCH, SEQ, EMB_DIM), dtype=jnp.float32)
    enc = jax.random.normal(k_enc, (BATCH, SEQ_ENC, EMB_DIM), dtype=jnp.float32)
    params = make_params(k_p)

    # Pack weights/biases ONCE (init time), not per forward call.
    packed = jax.tree_util.tree_map(jax.block_until_ready, pack_params(params))

    out = decoder_layer(x, enc, packed)
    out = jax.block_until_ready(out)

    ref = decoder_layer_ref(x, enc, params)
    assert out.shape == (BATCH, SEQ, EMB_DIM)
    assert jnp.allclose(out, ref, atol=2e-3, rtol=2e-3), "mismatch vs JAX reference"

    print("KERNEL_OK")
</pallas_src>

<mosaic_0001>
module attributes {stable_mosaic.version = 11 : i64} {
  func.func @decoder_layer_kernel(%arg0: memref<16x32xf32, #tpu.memory_space<vmem>>, %arg1: memref<16x32xf32, #tpu.memory_space<vmem>>, %arg2: memref<32x512xf32, #tpu.memory_space<vmem>>, %arg3: memref<16x128xf32, #tpu.memory_space<vmem>>, %arg4: memref<16x32xf32, #tpu.memory_space<vmem>>) attributes {dimension_semantics = [], scalar_prefetch = 0 : i64, scratch_operands = 0 : i64, tpu.core_type = #tpu.core_type<tc>} {
    %c0 = arith.constant 0 : index
    %c0_0 = arith.constant 0 : index
    %0 = vector.load %arg0[%c0, %c0_0] : memref<16x32xf32, #tpu.memory_space<vmem>>, vector<16x32xf32>
    %c0_1 = arith.constant 0 : index
    %c0_2 = arith.constant 0 : index
    %1 = vector.load %arg1[%c0_1, %c0_2] : memref<16x32xf32, #tpu.memory_space<vmem>>, vector<16x32xf32>
    %c0_3 = arith.constant 0 : index
    %c0_4 = arith.constant 0 : index
    %2 = vector.load %arg2[%c0_3, %c0_4] : memref<32x512xf32, #tpu.memory_space<vmem>>, vector<32x512xf32>
    %c0_5 = arith.constant 0 : index
    %c0_6 = arith.constant 0 : index
    %3 = vector.load %arg3[%c0_5, %c0_6] : memref<16x128xf32, #tpu.memory_space<vmem>>, vector<16x128xf32>
    %4 = tpu.iota {dimensions = array<i32: 0>} : vector<64x64xi32>
    %c3_i32 = arith.constant 3 : i32
    %5 = vector.broadcast %c3_i32 : i32 to vector<64x64xi32>
    %6 = arith.shrsi %4, %5 : vector<64x64xi32>
    %7 = tpu.iota {dimensions = array<i32: 1>} : vector<64x64xi32>
    %c3_i32_7 = arith.constant 3 : i32
    %8 = vector.broadcast %c3_i32_7 : i32 to vector<64x64xi32>
    %9 = arith.shrsi %7, %8 : vector<64x64xi32>
    %10 = arith.cmpi eq, %6, %9 : vector<64x64xi32>
    %cst = arith.constant 0.000000e+00 : f32
    %cst_8 = arith.constant -1.000000e+09 : f32
    %11 = vector.broadcast %cst : f32 to vector<64x64xf32>
    %12 = vector.broadcast %cst_8 : f32 to vector<64x64xf32>
    %13 = arith.select %10, %11, %12 : vector<64x64xi1>, vector<64x64xf32>
    %14 = vector.extract_strided_slice %2 {offsets = [0, 0], sizes = [32, 96], strides = [1, 1]} : vector<32x512xf32> to vector<32x96xf32>
    %cst_9 = arith.constant dense<0.000000e+00> : vector<16x96xf32>
    %15 = tpu.matmul %0, %14, %cst_9 {dimension_numbers = #tpu.dot_dimension_numbers<[1], [0], [0], [1], [0, 0, 1, 1], [], []>} : vector<16x32xf32>, vector<32x96xf32>, vector<16x96xf32> -> vector<16x96xf32>
    %16 = vector.extract_strided_slice %15 {offsets = [0, 0], sizes = [16, 32], strides = [1, 1]} : vector<16x96xf32> to vector<16x32xf32>
    %17 = vector.extract_strided_slice %3 {offsets = [0, 0], sizes = [1, 32], strides = [1, 1]} : vector<16x128xf32> to vector<1x32xf32>
    %18 = vector.broadcast %17 : vector<1x32xf32> to vector<16x32xf32>
    %19 = arith.addf %16, %18 : vector<16x32xf32>
    %20 = vector.extract_strided_slice %15 {offsets = [0, 32], sizes = [16, 32], strides = [1, 1]} : vector<16x96xf32> to vector<16x32xf32>
    %21 = vector.extract_strided_slice %3 {offsets = [1, 0], sizes = [1, 32], strides = [1, 1]} : vector<16x128xf32> to vector<1x32xf32>
    %22 = vector.broadcast %21 : vector<1x32xf32> to vector<16x32xf32>
    %23 = arith.addf %20, %22 : vector<16x32xf32>
    %24 = vector.extract_strided_slice %15 {offsets = [0, 64], sizes = [16, 32], strides = [1, 1]} : vector<16x96xf32> to vector<16x32xf32>
    %25 = vector.extract_strided_slice %3 {offsets = [2, 0], sizes = [1, 32], strides = [1, 1]} : vector<16x128xf32> to vector<1x32xf32>
    %26 = vector.broadcast %25 : vector<1x32xf32> to vector<16x32xf32>
    %27 = arith.addf %24, %26 : vector<16x32xf32>
    %28 = vector.extract_strided_slice %2 {offsets = [0, 96], sizes = [32, 32], strides = [1, 1]} : vector<32x512xf32> to vector<32x32xf32>
    %29 = vector.extract_strided_slice %19 {offsets = [0, 0], sizes = [16, 8], strides = [1, 1]} : vector<16x32xf32> to vector<16x8xf32>
    %30 = vector.extract_strided_slice %19 {offsets = [0, 8], sizes = [16, 8], strides = [1, 1]} : vector<16x32xf32> to vector<16x8xf32>
    %31 = vector.extract_strided_slice %19 {offsets = [0, 16], sizes = [16, 8], strides = [1, 1]} : vector<16x32xf32> to vector<16x8xf32>
    %32 = vector.extract_strided_slice %19 {offsets = [0, 24], sizes = [16, 8], strides = [1, 1]} : vector<16x32xf32> to vector<16x8xf32>
    %33 = tpu.concatenate %29, %30, %31, %32 in 0 : vector<16x8xf32>, vector<16x8xf32>, vector<16x8xf32>, vector<16x8xf32> -> vector<64x8xf32>
    %34 = vector.extract_strided_slice %23 {offsets = [0, 0], sizes = [16, 8], strides = [1, 1]} : vector<16x32xf32> to vector<16x8xf32>
    %35 = vector.extract_strided_slice %23 {offsets = [0, 8], sizes = [16, 8], strides = [1, 1]} : vector<16x32xf32> to vector<16x8xf32>
    %36 = vector.extract_strided_slice %23 {offsets = [0, 16], sizes = [16, 8], strides = [1, 1]} : vector<16x32xf32> to vector<16x8xf32>
    %37 = vector.extract_strided_slice %23 {offsets = [0, 24], sizes = [16, 8], strides = [1, 1]} : vector<16x32xf32> to vector<16x8xf32>
    %38 = tpu.concatenate %34, %35, %36, %37 in 0 : vector<16x8xf32>, vector<16x8xf32>, vector<16x8xf32>, vector<16x8xf32> -> vector<64x8xf32>
    %39 = vector.extract_strided_slice %27 {offsets = [0, 0], sizes = [16, 8], strides = [1, 1]} : vector<16x32xf32> to vector<16x8xf32>
    %40 = vector.extract_strided_slice %27 {offsets = [0, 8], sizes = [16, 8], strides = [1, 1]} : vector<16x32xf32> to vector<16x8xf32>
    %41 = vector.extract_strided_slice %27 {offsets = [0, 16], sizes = [16, 8], strides = [1, 1]} : vector<16x32xf32> to vector<16x8xf32>
    %42 = vector.extract_strided_slice %27 {offsets = [0, 24], sizes = [16, 8], strides = [1, 1]} : vector<16x32xf32> to vector<16x8xf32>
    %43 = tpu.concatenate %39, %40, %41, %42 in 0 : vector<16x8xf32>, vector<16x8xf32>, vector<16x8xf32>, vector<16x8xf32> -> vector<64x8xf32>
    %44 = tpu.transpose %38, [1, 0] : vector<64x8xf32> -> vector<8x64xf32>
    %cst_10 = arith.constant dense<0.000000e+00> : vector<64x64xf32>
    %45 = tpu.matmul %33, %44, %cst_10 {dimension_numbers = #tpu.dot_dimension_numbers<[1], [0], [0], [1], [0, 0, 1, 1], [], []>} : vector<64x8xf32>, vector<8x64xf32>, vector<64x64xf32> -> vector<64x64xf32>
    %46 = arith.addf %45, %13 : vector<64x64xf32>
    %cst_11 = arith.constant dense<0xFF800000> : vector<64xf32>
    %47 = vector.multi_reduction <maximumf>, %46, %cst_11 [1] : vector<64x64xf32> to vector<64xf32>
    %48 = vector.shape_cast %47 : vector<64xf32> to vector<64x1xf32>
    %49 = vector.broadcast %48 : vector<64x1xf32> to vector<64x64xf32>
    %50 = arith.subf %46, %49 : vector<64x64xf32>
    %51 = math.exp %50 : vector<64x64xf32>
    %cst_12 = arith.constant dense<0.000000e+00> : vector<64xf32>
    %52 = vector.multi_reduction <add>, %51, %cst_12 [1] : vector<64x64xf32> to vector<64xf32>
    %53 = vector.shape_cast %52 : vector<64xf32> to vector<64x1xf32>
    %54 = vector.broadcast %53 : vector<64x1xf32> to vector<64x64xf32>
    %55 = arith.divf %51, %54 : vector<64x64xf32>
    %cst_13 = arith.constant dense<0.000000e+00> : vector<64x8xf32>
    %56 = tpu.matmul %55, %43, %cst_13 {dimension_numbers = #tpu.dot_dimension_numbers<[1], [0], [0], [1], [0, 0, 1, 1], [], []>} : vector<64x64xf32>, vector<64x8xf32>, vector<64x8xf32> -> vector<64x8xf32>
    %57 = vector.extract_strided_slice %56 {offsets = [0, 0], sizes = [16, 8], strides = [1, 1]} : vector<64x8xf32> to vector<16x8xf32>
    %58 = vector.extract_strided_slice %56 {offsets = [16, 0], sizes = [16, 8], strides = [1, 1]} : vector<64x8xf32> to vector<16x8xf32>
    %59 = vector.extract_strided_slice %56 {offsets = [32, 0], sizes = [16, 8], strides = [1, 1]} : vector<64x8xf32> to vector<16x8xf32>
    %60 = vector.extract_strided_slice %56 {offsets = [48, 0], sizes = [16, 8], strides = [1, 1]} : vector<64x8xf32> to vector<16x8xf32>
    %61 = tpu.concatenate %57, %58, %59, %60 in 1 : vector<16x8xf32>, vector<16x8xf32>, vector<16x8xf32>, vector<16x8xf32> -> vector<16x32xf32>
    %cst_14 = arith.constant dense<0.000000e+00> : vector<16x32xf32>
    %62 = tpu.matmul %61, %28, %cst_14 {dimension_numbers = #tpu.dot_dimension_numbers<[1], [0], [0], [1], [0, 0, 1, 1], [], []>} : vector<16x32xf32>, vector<32x32xf32>, vector<16x32xf32> -> vector<16x32xf32>
    %63 = vector.extract_strided_slice %3 {offsets = [3, 0], sizes = [1, 32], strides = [1, 1]} : vector<16x128xf32> to vector<1x32xf32>
    %64 = vector.broadcast %63 : vector<1x32xf32> to vector<16x32xf32>
    %65 = arith.addf %62, %64 : vector<16x32xf32>
    %66 = arith.addf %0, %65 : vector<16x32xf32>
    %67 = vector.extract_strided_slice %3 {offsets = [9, 0], sizes = [1, 32], strides = [1, 1]} : vector<16x128xf32> to vector<1x32xf32>
    %68 = vector.extract_strided_slice %3 {offsets = [10, 0], sizes = [1, 32], strides = [1, 1]} : vector<16x128xf32> to vector<1x32xf32>
    %cst_15 = arith.constant dense<0.000000e+00> : vector<16xf32>
    %69 = vector.multi_reduction <add>, %66, %cst_15 [1] : vector<16x32xf32> to vector<16xf32>
    %70 = vector.shape_cast %69 : vector<16xf32> to vector<16x1xf32>
    %cst_16 = arith.constant 3.200000e+01 : f32
    %71 = vector.broadcast %cst_16 : f32 to vector<16x1xf32>
    %72 = arith.divf %70, %71 : vector<16x1xf32>
    %73 = vector.broadcast %72 : vector<16x1xf32> to vector<16x32xf32>
    %74 = arith.subf %66, %73 : vector<16x32xf32>
    %75 = arith.mulf %74, %74 : vector<16x32xf32>
    %cst_17 = arith.constant dense<0.000000e+00> : vector<16xf32>
    %76 = vector.multi_reduction <add>, %75, %cst_17 [1] : vector<16x32xf32> to vector<16xf32>
    %77 = vector.shape_cast %76 : vector<16xf32> to vector<16x1xf32>
    %cst_18 = arith.constant 3.200000e+01 : f32
    %78 = vector.broadcast %cst_18 : f32 to vector<16x1xf32>
    %79 = arith.divf %77, %78 : vector<16x1xf32>
    %80 = vector.broadcast %72 : vector<16x1xf32> to vector<16x32xf32>
    %81 = arith.subf %66, %80 : vector<16x32xf32>
    %cst_19 = arith.constant 9.99999974E-6 : f32
    %82 = vector.broadcast %cst_19 : f32 to vector<16x1xf32>
    %83 = arith.addf %79, %82 : vector<16x1xf32>
    %84 = math.rsqrt %83 : vector<16x1xf32>
    %85 = vector.broadcast %84 : vector<16x1xf32> to vector<16x32xf32>
    %86 = arith.mulf %81, %85 : vector<16x32xf32>
    %87 = vector.broadcast %67 : vector<1x32xf32> to vector<16x32xf32>
    %88 = arith.mulf %86, %87 : vector<16x32xf32>
    %89 = vector.broadcast %68 : vector<1x32xf32> to vector<16x32xf32>
    %90 = arith.addf %88, %89 : vector<16x32xf32>
    %91 = vector.extract_strided_slice %2 {offsets = [0, 128], sizes = [32, 32], strides = [1, 1]} : vector<32x512xf32> to vector<32x32xf32>
    %cst_20 = arith.constant dense<0.000000e+00> : vector<16x32xf32>
    %92 = tpu.matmul %90, %91, %cst_20 {dimension_numbers = #tpu.dot_dimension_numbers<[1], [0], [0], [1], [0, 0, 1, 1], [], []>} : vector<16x32xf32>, vector<32x32xf32>, vector<16x32xf32> -> vector<16x32xf32>
    %93 = vector.extract_strided_slice %3 {offsets = [4, 0], sizes = [1, 32], strides = [1, 1]} : vector<16x128xf32> to vector<1x32xf32>
    %94 = vector.broadcast %93 : vector<1x32xf32> to vector<16x32xf32>
    %95 = arith.addf %92, %94 : vector<16x32xf32>
    %96 = vector.extract_strided_slice %2 {offsets = [0, 160], sizes = [32, 64], strides = [1, 1]} : vector<32x512xf32> to vector<32x64xf32>
    %cst_21 = arith.constant dense<0.000000e+00> : vector<16x64xf32>
    %97 = tpu.matmul %1, %96, %cst_21 {dimension_numbers = #tpu.dot_dimension_numbers<[1], [0], [0], [1], [0, 0, 1, 1], [], []>} : vector<16x32xf32>, vector<32x64xf32>, vector<16x64xf32> -> vector<16x64xf32>
    %98 = vector.extract_strided_slice %97 {offsets = [0, 0], sizes = [16, 32], strides = [1, 1]} : vector<16x64xf32> to vector<16x32xf32>
    %99 = vector.extract_strided_slice %3 {offsets = [5, 0], sizes = [1, 32], strides = [1, 1]} : vector<16x128xf32> to vector<1x32xf32>
    %100 = vector.broadcast %99 : vector<1x32xf32> to vector<16x32xf32>
    %101 = arith.addf %98, %100 : vector<16x32xf32>
    %102 = vector.extract_strided_slice %97 {offsets = [0, 32], sizes = [16, 32], strides = [1, 1]} : vector<16x64xf32> to vector<16x32xf32>
    %103 = vector.extract_strided_slice %3 {offsets = [6, 0], sizes = [1, 32], strides = [1, 1]} : vector<16x128xf32> to vector<1x32xf32>
    %104 = vector.broadcast %103 : vector<1x32xf32> to vector<16x32xf32>
    %105 = arith.addf %102, %104 : vector<16x32xf32>
    %106 = vector.extract_strided_slice %2 {offsets = [0, 224], sizes = [32, 32], strides = [1, 1]} : vector<32x512xf32> to vector<32x32xf32>
    %107 = vector.extract_strided_slice %95 {offsets = [0, 0], sizes = [16, 8], strides = [1, 1]} : vector<16x32xf32> to vector<16x8xf32>
    %108 = vector.extract_strided_slice %95 {offsets = [0, 8], sizes = [16, 8], strides = [1, 1]} : vector<16x32xf32> to vector<16x8xf32>
    %109 = vector.extract_strided_slice %95 {offsets = [0, 16], sizes = [16, 8], strides = [1, 1]} : vector<16x32xf32> to vector<16x8xf32>
    %110 = vector.extract_strided_slice %95 {offsets = [0, 24], sizes = [16, 8], strides = [1, 1]} : vector<16x32xf32> to vector<16x8xf32>
    %111 = tpu.concatenate %107, %108, %109, %110 in 0 : vector<16x8xf32>, vector<16x8xf32>, vector<16x8xf32>, vector<16x8xf32> -> vector<64x8xf32>
    %112 = vector.extract_strided_slice %101 {offsets = [0, 0], sizes = [16, 8], strides = [1, 1]} : vector<16x32xf32> to vector<16x8xf32>
    %113 = vector.extract_strided_slice %101 {offsets = [0, 8], sizes = [16, 8], strides = [1, 1]} : vector<16x32xf32> to vector<16x8xf32>
    %114 = vector.extract_strided_slice %101 {offsets = [0, 16], sizes = [16, 8], strides = [1, 1]} : vector<16x32xf32> to vector<16x8xf32>
    %115 = vector.extract_strided_slice %101 {offsets = [0, 24], sizes = [16, 8], strides = [1, 1]} : vector<16x32xf32> to vector<16x8xf32>
    %116 = tpu.concatenate %112, %113, %114, %115 in 0 : vector<16x8xf32>, vector<16x8xf32>, vector<16x8xf32>, vector<16x8xf32> -> vector<64x8xf32>
    %117 = vector.extract_strided_slice %105 {offsets = [0, 0], sizes = [16, 8], strides = [1, 1]} : vector<16x32xf32> to vector<16x8xf32>
    %118 = vector.extract_strided_slice %105 {offsets = [0, 8], sizes = [16, 8], strides = [1, 1]} : vector<16x32xf32> to vector<16x8xf32>
    %119 = vector.extract_strided_slice %105 {offsets = [0, 16], sizes = [16, 8], strides = [1, 1]} : vector<16x32xf32> to vector<16x8xf32>
    %120 = vector.extract_strided_slice %105 {offsets = [0, 24], sizes = [16, 8], strides = [1, 1]} : vector<16x32xf32> to vector<16x8xf32>
    %121 = tpu.concatenate %117, %118, %119, %120 in 0 : vector<16x8xf32>, vector<16x8xf32>, vector<16x8xf32>, vector<16x8xf32> -> vector<64x8xf32>
    %122 = tpu.transpose %116, [1, 0] : vector<64x8xf32> -> vector<8x64xf32>
    %cst_22 = arith.constant dense<0.000000e+00> : vector<64x64xf32>
    %123 = tpu.matmul %111, %122, %cst_22 {dimension_numbers = #tpu.dot_dimension_numbers<[1], [0], [0], [1], [0, 0, 1, 1], [], []>} : vector<64x8xf32>, vector<8x64xf32>, vector<64x64xf32> -> vector<64x64xf32>
    %124 = arith.addf %123, %13 : vector<64x64xf32>
    %cst_23 = arith.constant dense<0xFF800000> : vector<64xf32>
    %125 = vector.multi_reduction <maximumf>, %124, %cst_23 [1] : vector<64x64xf32> to vector<64xf32>
    %126 = vector.shape_cast %125 : vector<64xf32> to vector<64x1xf32>
    %127 = vector.broadcast %126 : vector<64x1xf32> to vector<64x64xf32>
    %128 = arith.subf %124, %127 : vector<64x64xf32>
    %129 = math.exp %128 : vector<64x64xf32>
    %cst_24 = arith.constant dense<0.000000e+00> : vector<64xf32>
    %130 = vector.multi_reduction <add>, %129, %cst_24 [1] : vector<64x64xf32> to vector<64xf32>
    %131 = vector.shape_cast %130 : vector<64xf32> to vector<64x1xf32>
    %132 = vector.broadcast %131 : vector<64x1xf32> to vector<64x64xf32>
    %133 = arith.divf %129, %132 : vector<64x64xf32>
    %cst_25 = arith.constant dense<0.000000e+00> : vector<64x8xf32>
    %134 = tpu.matmul %133, %121, %cst_25 {dimension_numbers = #tpu.dot_dimension_numbers<[1], [0], [0], [1], [0, 0, 1, 1], [], []>} : vector<64x64xf32>, vector<64x8xf32>, vector<64x8xf32> -> vector<64x8xf32>
    %135 = vector.extract_strided_slice %134 {offsets = [0, 0], sizes = [16, 8], strides = [1, 1]} : vector<64x8xf32> to vector<16x8xf32>
    %136 = vector.extract_strided_slice %134 {offsets = [16, 0], sizes = [16, 8], strides = [1, 1]} : vector<64x8xf32> to vector<16x8xf32>
    %137 = vector.extract_strided_slice %134 {offsets = [32, 0], sizes = [16, 8], strides = [1, 1]} : vector<64x8xf32> to vector<16x8xf32>
    %138 = vector.extract_strided_slice %134 {offsets = [48, 0], sizes = [16, 8], strides = [1, 1]} : vector<64x8xf32> to vector<16x8xf32>
    %139 = tpu.concatenate %135, %136, %137, %138 in 1 : vector<16x8xf32>, vector<16x8xf32>, vector<16x8xf32>, vector<16x8xf32> -> vector<16x32xf32>
    %cst_26 = arith.constant dense<0.000000e+00> : vector<16x32xf32>
    %140 = tpu.matmul %139, %106, %cst_26 {dimension_numbers = #tpu.dot_dimension_numbers<[1], [0], [0], [1], [0, 0, 1, 1], [], []>} : vector<16x32xf32>, vector<32x32xf32>, vector<16x32xf32> -> vector<16x32xf32>
    %141 = vector.extract_strided_slice %3 {offsets = [7, 0], sizes = [1, 32], strides = [1, 1]} : vector<16x128xf32> to vector<1x32xf32>
    %142 = vector.broadcast %141 : vector<1x32xf32> to vector<16x32xf32>
    %143 = arith.addf %140, %142 : vector<16x32xf32>
    %144 = arith.addf %90, %143 : vector<16x32xf32>
    %145 = vector.extract_strided_slice %3 {offsets = [11, 0], sizes = [1, 32], strides = [1, 1]} : vector<16x128xf32> to vector<1x32xf32>
    %146 = vector.extract_strided_slice %3 {offsets = [12, 0], sizes = [1, 32], strides = [1, 1]} : vector<16x128xf32> to vector<1x32xf32>
    %cst_27 = arith.constant dense<0.000000e+00> : vector<16xf32>
    %147 = vector.multi_reduction <add>, %144, %cst_27 [1] : vector<16x32xf32> to vector<16xf32>
    %148 = vector.shape_cast %147 : vector<16xf32> to vector<16x1xf32>
    %cst_28 = arith.constant 3.200000e+01 : f32
    %149 = vector.broadcast %cst_28 : f32 to vector<16x1xf32>
    %150 = arith.divf %148, %149 : vector<16x1xf32>
    %151 = vector.broadcast %150 : vector<16x1xf32> to vector<16x32xf32>
    %152 = arith.subf %144, %151 : vector<16x32xf32>
    %153 = arith.mulf %152, %152 : vector<16x32xf32>
    %cst_29 = arith.constant dense<0.000000e+00> : vector<16xf32>
    %154 = vector.multi_reduction <add>, %153, %cst_29 [1] : vector<16x32xf32> to vector<16xf32>
    %155 = vector.shape_cast %154 : vector<16xf32> to vector<16x1xf32>
    %cst_30 = arith.constant 3.200000e+01 : f32
    %156 = vector.broadcast %cst_30 : f32 to vector<16x1xf32>
    %157 = arith.divf %155, %156 : vector<16x1xf32>
    %158 = vector.broadcast %150 : vector<16x1xf32> to vector<16x32xf32>
    %159 = arith.subf %144, %158 : vector<16x32xf32>
    %cst_31 = arith.constant 9.99999974E-6 : f32
    %160 = vector.broadcast %cst_31 : f32 to vector<16x1xf32>
    %161 = arith.addf %157, %160 : vector<16x1xf32>
    %162 = math.rsqrt %161 : vector<16x1xf32>
    %163 = vector.broadcast %162 : vector<16x1xf32> to vector<16x32xf32>
    %164 = arith.mulf %159, %163 : vector<16x32xf32>
    %165 = vector.broadcast %145 : vector<1x32xf32> to vector<16x32xf32>
    %166 = arith.mulf %164, %165 : vector<16x32xf32>
    %167 = vector.broadcast %146 : vector<1x32xf32> to vector<16x32xf32>
    %168 = arith.addf %166, %167 : vector<16x32xf32>
    %169 = vector.extract_strided_slice %2 {offsets = [0, 256], sizes = [32, 128], strides = [1, 1]} : vector<32x512xf32> to vector<32x128xf32>
    %cst_32 = arith.constant dense<0.000000e+00> : vector<16x128xf32>
    %170 = tpu.matmul %168, %169, %cst_32 {dimension_numbers = #tpu.dot_dimension_numbers<[1], [0], [0], [1], [0, 0, 1, 1], [], []>} : vector<16x32xf32>, vector<32x128xf32>, vector<16x128xf32> -> vector<16x128xf32>
    %171 = vector.extract_strided_slice %3 {offsets = [15, 0], sizes = [1, 128], strides = [1, 1]} : vector<16x128xf32> to vector<1x128xf32>
    %172 = vector.broadcast %171 : vector<1x128xf32> to vector<16x128xf32>
    %173 = arith.addf %170, %172 : vector<16x128xf32>
    %cst_33 = arith.constant 0.000000e+00 : f32
    %174 = vector.broadcast %cst_33 : f32 to vector<16x128xf32>
    %175 = arith.maximumf %173, %174 : vector<16x128xf32>
    %176 = vector.extract_strided_slice %2 {offsets = [0, 384], sizes = [32, 128], strides = [1, 1]} : vector<32x512xf32> to vector<32x128xf32>
    %177 = tpu.transpose %176, [1, 0] : vector<32x128xf32> -> vector<128x32xf32>
    %cst_34 = arith.constant dense<0.000000e+00> : vector<16x32xf32>
    %178 = tpu.matmul %175, %177, %cst_34 {dimension_numbers = #tpu.dot_dimension_numbers<[1], [0], [0], [1], [0, 0, 1, 1], [], []>} : vector<16x128xf32>, vector<128x32xf32>, vector<16x32xf32> -> vector<16x32xf32>
    %179 = vector.extract_strided_slice %3 {offsets = [8, 0], sizes = [1, 32], strides = [1, 1]} : vector<16x128xf32> to vector<1x32xf32>
    %180 = vector.broadcast %179 : vector<1x32xf32> to vector<16x32xf32>
    %181 = arith.addf %178, %180 : vector<16x32xf32>
    %182 = arith.addf %168, %181 : vector<16x32xf32>
    %183 = vector.extract_strided_slice %3 {offsets = [13, 0], sizes = [1, 32], strides = [1, 1]} : vector<16x128xf32> to vector<1x32xf32>
    %184 = vector.extract_strided_slice %3 {offsets = [14, 0], sizes = [1, 32], strides = [1, 1]} : vector<16x128xf32> to vector<1x32xf32>
    %cst_35 = arith.constant dense<0.000000e+00> : vector<16xf32>
    %185 = vector.multi_reduction <add>, %182, %cst_35 [1] : vector<16x32xf32> to vector<16xf32>
    %186 = vector.shape_cast %185 : vector<16xf32> to vector<16x1xf32>
    %cst_36 = arith.constant 3.200000e+01 : f32
    %187 = vector.broadcast %cst_36 : f32 to vector<16x1xf32>
    %188 = arith.divf %186, %187 : vector<16x1xf32>
    %189 = vector.broadcast %188 : vector<16x1xf32> to vector<16x32xf32>
    %190 = arith.subf %182, %189 : vector<16x32xf32>
    %191 = arith.mulf %190, %190 : vector<16x32xf32>
    %cst_37 = arith.constant dense<0.000000e+00> : vector<16xf32>
    %192 = vector.multi_reduction <add>, %191, %cst_37 [1] : vector<16x32xf32> to vector<16xf32>
    %193 = vector.shape_cast %192 : vector<16xf32> to vector<16x1xf32>
    %cst_38 = arith.constant 3.200000e+01 : f32
    %194 = vector.broadcast %cst_38 : f32 to vector<16x1xf32>
    %195 = arith.divf %193, %194 : vector<16x1xf32>
    %196 = vector.broadcast %188 : vector<16x1xf32> to vector<16x32xf32>
    %197 = arith.subf %182, %196 : vector<16x32xf32>
    %cst_39 = arith.constant 9.99999974E-6 : f32
    %198 = vector.broadcast %cst_39 : f32 to vector<16x1xf32>
    %199 = arith.addf %195, %198 : vector<16x1xf32>
    %200 = math.rsqrt %199 : vector<16x1xf32>
    %201 = vector.broadcast %200 : vector<16x1xf32> to vector<16x32xf32>
    %202 = arith.mulf %197, %201 : vector<16x32xf32>
    %203 = vector.broadcast %183 : vector<1x32xf32> to vector<16x32xf32>
    %204 = arith.mulf %202, %203 : vector<16x32xf32>
    %205 = vector.broadcast %184 : vector<1x32xf32> to vector<16x32xf32>
    %206 = arith.addf %204, %205 : vector<16x32xf32>
    %c0_40 = arith.constant 0 : index
    %c0_41 = arith.constant 0 : index
    %207 = vector.load %arg4[%c0_40, %c0_41] : memref<16x32xf32, #tpu.memory_space<vmem>>, vector<16x32xf32>
    tpu.vector_store %arg4[%c0_40, %c0_41], %206 {strides = array<i32>} : memref<16x32xf32, #tpu.memory_space<vmem>>, vector<16x32xf32>,
    return
  }
}

</mosaic_0001>

<llo_original>
// kernel: tpu_custom_call.1
$region0: #{tpu_custom_call.1}
  #allocation0 [shape = 'u32[]', space=smem, size = 0x4, offset = 0x4, fixed_abs, tag = 'smem constant byte address 0x4 - core index']
  #allocation1 [shape = 'u32[144,128]{1,0:T(1,128)}', space=vmem, size = 0x12000, scoped, tag = 'internal scratch']
  %s0 = inlined_call_operand.hbm [shape: f32[16,32], index: 0, kind: input, shape index: {}]
  %s1 = inlined_call_operand.hbm [shape: f32[16,32], index: 1, kind: input, shape index: {}]
  %s2 = inlined_call_operand.hbm [shape: f32[32,512], index: 2, kind: input, shape index: {}]
  %s3 = inlined_call_operand.hbm [shape: f32[16,128], index: 3, kind: input, shape index: {}]
  %s4 = inlined_call_operand.hbm [shape: f32[16,32], index: 4, kind: output, shape index: {}]
  %s5 = sld [smem:[#allocation0]]
  $region42: #{tpu_custom_call.1} parent=0
    _
  %s7 = ssub.s32 1, %s5
  %s8 = scalar_select 0, %s7, %s5
  $region1: #{tpu_custom_call.1} parent=0
    #allocation2 [shape = 'u8[8192]{0}', space=vmem, size = 0x2000, scoped, tag = 'input window, operand 0, single buffered']
    #allocation3 [shape = 's32[1]{0}', space=sflag, size = 0x4, scoped, tag = 'scoped memory for tpu_custom_call.1']
    #allocation4 [shape = 's32[1]{0}', space=sflag, size = 0x4, scoped, tag = 'scoped memory for tpu_custom_call.1']
    #allocation5 [shape = 'u8[8192]{0}', space=vmem, size = 0x2000, scoped, tag = 'input window, operand 1, single buffered']
    #allocation6 [shape = 's32[1]{0}', space=sflag, size = 0x4, scoped, tag = 'scoped memory for tpu_custom_call.1']
    #allocation7 [shape = 'u8[65536]{0}', space=vmem, size = 0x10000, scoped, tag = 'input window, operand 2, single buffered']
    #allocation8 [shape = 'u8[8192]{0}', space=vmem, size = 0x2000, scoped, tag = 'input window, operand 3, single buffered']
    #allocation9 [shape = 's32[1]{0}', space=sflag, size = 0x4, scoped, tag = 'scoped memory for tpu_custom_call.1']
    #allocation10 [shape = 'u8[8192]{0}', space=vmem, size = 0x2000, scoped, tag = 'output window, operand 0, single buffered']
    %9 = vsyncpa [#allocation3], 0
    %10 = vsyncpa [#allocation6], 0
    %11 = vsyncpa [#allocation9], 0
    %12 = vsyncpa [#allocation4], 0
    // Predicated region
    $region2: #{tpu_custom_call.1} parent=1 // pred_check
      _
    $region3: #{tpu_custom_call.1} parent=1 // pred_check_branch
      %14 = sbr.rel (0) target = $region5
    $region4: #{tpu_custom_call.1} parent=1 // pred_region
      %s16 = ssub.s32 256, 256
      %17 = vsyncadd [#allocation3], %s16
      %s18 = sshll.u32 [#allocation2], 4
      %s19 = int_to_ptr.vmem [resolvable:$true] %s18
      %24 = dma.hbm_to_vmem [thread:$0]  %s0, 256, %s19, [#allocation3], 128, 128, 8
    $region5: #{tpu_custom_call.1} parent=1 // pred_fallthru
      _
    // Predicated region
    $region6: #{tpu_custom_call.1} parent=1 // pred_check
      _
    $region7: #{tpu_custom_call.1} parent=1 // pred_check_branch
      %26 = sbr.rel (0) target = $region9
    $region8: #{tpu_custom_call.1} parent=1 // pred_region
      %s28 = ssub.s32 256, 256
      %29 = vsyncadd [#allocation6], %s28
      %s30 = sshll.u32 [#allocation5], 4
      %s31 = int_to_ptr.vmem [resolvable:$true] %s30
      %36 = dma.hbm_to_vmem [thread:$0]  %s1, 256, %s31, [#allocation6], 128, 128, 8
    $region9: #{tpu_custom_call.1} parent=1 // pred_fallthru
      _
    // Predicated region
    $region10: #{tpu_custom_call.1} parent=1 // pred_check
      _
    $region11: #{tpu_custom_call.1} parent=1 // pred_check_branch
      %38 = sbr.rel (0) target = $region13
    $region12: #{tpu_custom_call.1} parent=1 // pred_region
      %s40 = ssub.s32 2048, 2048
      %41 = vsyncadd [#allocation6], %s40
      %s42 = sshll.u32 [#allocation7], 4
      %s43 = int_to_ptr.vmem [resolvable:$true] %s42
      %48 = dma.hbm_to_vmem [thread:$0]  %s2, 2048, %s43, [#allocation6], 512, 512, 32
    $region13: #{tpu_custom_call.1} parent=1 // pred_fallthru
      _
    // Predicated region
    $region14: #{tpu_custom_call.1} parent=1 // pred_check
      _
    $region15: #{tpu_custom_call.1} parent=1 // pred_check_branch
      %50 = sbr.rel (0) target = $region17
    $region16: #{tpu_custom_call.1} parent=1 // pred_region
      %s52 = ssub.s32 256, 256
      %53 = vsyncadd [#allocation9], %s52
      %s54 = sshll.u32 [#allocation8], 4
      %s55 = int_to_ptr.vmem [resolvable:$true] %s54
      %60 = dma.hbm_to_vmem [thread:$0]  %s3, 256, %s55, [#allocation9], 128, 128, 8
    $region17: #{tpu_custom_call.1} parent=1 // pred_fallthru
      _
    // Predicated region
    $region18: #{tpu_custom_call.1} parent=1 // pred_check
      _
    $region19: #{tpu_custom_call.1} parent=1 // pred_check_branch
      %62 = sbr.rel (0) target = $region21
    $region20: #{tpu_custom_call.1} parent=1 // pred_region
      %63 = dma.done [#allocation3], 256
    $region21: #{tpu_custom_call.1} parent=1 // pred_fallthru
      _
    // Predicated region
    $region22: #{tpu_custom_call.1} parent=1 // pred_check
      _
    $region23: #{tpu_custom_call.1} parent=1 // pred_check_branch
      %65 = sbr.rel (0) target = $region25
    $region24: #{tpu_custom_call.1} parent=1 // pred_region
      %66 = dma.done [#allocation6], 256
    $region25: #{tpu_custom_call.1} parent=1 // pred_fallthru
      _
    // Predicated region
    $region26: #{tpu_custom_call.1} parent=1 // pred_check
      _
    $region27: #{tpu_custom_call.1} parent=1 // pred_check_branch
      %68 = sbr.rel (0) target = $region29
    $region28: #{tpu_custom_call.1} parent=1 // pred_region
      %69 = dma.done [#allocation6], 2048
    $region29: #{tpu_custom_call.1} parent=1 // pred_fallthru
      _
    // Predicated region
    $region30: #{tpu_custom_call.1} parent=1 // pred_check
      _
    $region31: #{tpu_custom_call.1} parent=1 // pred_check_branch
      %71 = sbr.rel (0) target = $region33
    $region32: #{tpu_custom_call.1} parent=1 // pred_region
      %72 = dma.done [#allocation9], 256
    $region33: #{tpu_custom_call.1} parent=1 // pred_fallthru
      _
    %v73 = vld [vmem:[#allocation2] sm:$0xff]
    %v74 = vld [vmem:[#allocation2 + $0x8] sm:$0xff]
    %v75 = vld [vmem:[#allocation5] sm:$0xff]
    %v76 = vld [vmem:[#allocation5 + $0x8] sm:$0xff]
    %v77 = vld [vmem:[#allocation7] sm:$0xff]
    %v78 = vld [vmem:[#allocation7 + $0x8] sm:$0xff]
    %v79 = vld [vmem:[#allocation7 + $0x10] sm:$0xff]
    %v80 = vld [vmem:[#allocation7 + $0x18] sm:$0xff]
    %v81 = vld [vmem:[#allocation7 + $0x20] sm:$0xff]
    %v82 = vld [vmem:[#allocation7 + $0x28] sm:$0xff]
    %v83 = vld [vmem:[#allocation7 + $0x30] sm:$0xff]
    %v84 = vld [vmem:[#allocation7 + $0x38] sm:$0xff]
    %v85 = vld [vmem:[#allocation7 + $0x40] sm:$0xff]
    %v86 = vld [vmem:[#allocation7 + $0x48] sm:$0xff]
    %v87 = vld [vmem:[#allocation7 + $0x50] sm:$0xff]
    %v88 = vld [vmem:[#allocation7 + $0x58] sm:$0xff]
    %v89 = vld [vmem:[#allocation7 + $0x60] sm:$0xff]
    %v90 = vld [vmem:[#allocation7 + $0x68] sm:$0xff]
    %v91 = vld [vmem:[#allocation7 + $0x70] sm:$0xff]
    %v92 = vld [vmem:[#allocation7 + $0x78] sm:$0xff]
    %v93 = vld [vmem:[#allocation8] sm:$0xff]
    %v94 = vld [vmem:[#allocation8 + $0x8] sm:$0xff]
    %v95 = vlaneseq
    %v96 = vshrl.u32 %v95, 7
    %v97 = vadd.s32 %v96, 8
    %v98 = vadd.s32 %v96, 16
    %v99 = vadd.s32 %v96, 24
    %v100 = vadd.s32 %v96, 32
    %v101 = vadd.s32 %v96, 40
    %v102 = vadd.s32 %v96, 48
    %v103 = vadd.s32 %v96, 56
    %v104 = vshra.s32 %v96, 3
    %v105 = vshra.s32 %v97, 3
    %v106 = vshra.s32 %v98, 3
    %v107 = vshra.s32 %v99, 3
    %v108 = vshra.s32 %v100, 3
    %v109 = vshra.s32 %v101, 3
    %v110 = vshra.s32 %v102, 3
    %v111 = vshra.s32 %v103, 3
    %v112 = vlaneseq
    %v113 = vand.u32 %v112, 127
    %v114 = vshra.s32 %v113, 3
    %vm115 = vcmp.eq.s32.totalorder %v104, %v114
    %vm116 = vcmp.eq.s32.totalorder %v105, %v114
    %vm117 = vcmp.eq.s32.totalorder %v106, %v114
    %vm118 = vcmp.eq.s32.totalorder %v107, %v114
    %vm119 = vcmp.eq.s32.totalorder %v108, %v114
    %vm120 = vcmp.eq.s32.totalorder %v109, %v114
    %vm121 = vcmp.eq.s32.totalorder %v110, %v114
    %vm122 = vcmp.eq.s32.totalorder %v111, %v114
    %v123 = vsel %vm115, 0.0, -1e+09
    %v124 = vsel %vm116, 0.0, -1e+09
    %v125 = vsel %vm117, 0.0, -1e+09
    %v126 = vsel %vm118, 0.0, -1e+09
    %v127 = vsel %vm119, 0.0, -1e+09
    %v128 = vsel %vm120, 0.0, -1e+09
    %v129 = vsel %vm121, 0.0, -1e+09
    %v130 = vsel %vm122, 0.0, -1e+09
    %vm131 = vcmask 261120
    %v133 = vsel %vm131, %v73, 0
    %v136 = vsel %vm131, %v74, 0
    %138 = vmatprep.subr.mxu0 0.0
    %139 = vmatpush1.msra.mxu0 0.0
    %140 = vmatprep.subr.mxu0 0.0
    %141 = vmatpush1.msra.mxu0 0.0
    %142 = vmatprep.subr.mxu0 0.0
    %143 = vmatpush1.msra.mxu0 0.0
    %144 = vmatprep.subr.mxu0 0.0
    %145 = vmatpush1.msra.mxu0 0.0
    %146 = vmatprep.subr.mxu0 0.0
    %147 = vmatpush1.msra.mxu0 0.0
    %148 = vmatprep.subr.mxu0 0.0
    %149 = vmatpush1.msra.mxu0 0.0
    %150 = vmatprep.subr.mxu0 0.0
    %151 = vmatpush1.msra.mxu0 0.0
    %152 = vmatprep.subr.mxu0 0.0
    %153 = vmatpush1.msra.mxu0 0.0
    %154 = vmatprep.subr.mxu0 0.0
    %155 = vmatpush1.msra.mxu0 0.0
    %156 = vmatprep.subr.mxu0 0.0
    %157 = vmatpush1.msra.mxu0 0.0
    %158 = vmatprep.subr.mxu0 0.0
    %159 = vmatpush1.msra.mxu0 0.0
    %160 = vmatprep.subr.mxu0 0.0
    %161 = vmatpush1.msra.mxu0 0.0
    %162 = vmatprep.subr.mxu0 0.0
    %163 = vmatpush1.msra.mxu0 %v89
    %164 = vmatprep.subr.mxu0 0.0
    %165 = vmatpush1.msra.mxu0 %v85
    %166 = vmatprep.subr.mxu0 0.0
    %167 = vmatpush1.msra.mxu0 %v81
    %168 = vmatprep.subr.mxu0 0.0
    %169 = vmatpush1.msra.mxu0 %v77
    %170 = vmatprep.subr.mxu0 0.0
    %171 = vmatpush2.msra.mxu0 0.0
    %172 = vmatprep.subr.mxu0 0.0
    %173 = vmatpush2.msra.mxu0 0.0
    %174 = vmatprep.subr.mxu0 0.0
    %175 = vmatpush2.msra.mxu0 0.0
    %176 = vmatprep.subr.mxu0 0.0
    %177 = vmatpush2.msra.mxu0 0.0
    %178 = vmatprep.subr.mxu0 0.0
    %179 = vmatpush2.msra.mxu0 0.0
    %180 = vmatprep.subr.mxu0 0.0
    %181 = vmatpush2.msra.mxu0 0.0
    %182 = vmatprep.subr.mxu0 0.0
    %183 = vmatpush2.msra.mxu0 0.0
    %184 = vmatprep.subr.mxu0 0.0
    %185 = vmatpush2.msra.mxu0 0.0
    %186 = vmatprep.subr.mxu0 0.0
    %187 = vmatpush2.msra.mxu0 0.0
    %188 = vmatprep.subr.mxu0 0.0
    %189 = vmatpush2.msra.mxu0 0.0
    %190 = vmatprep.subr.mxu0 0.0
    %191 = vmatpush2.msra.mxu0 0.0
    %192 = vmatprep.subr.mxu0 0.0
    %193 = vmatpush2.msra.mxu0 0.0
    %194 = vmatprep.subr.mxu0 0.0
    %195 = vmatpush2.msra.mxu0 0.0
    %196 = vmatprep.subr.mxu0 0.0
    %197 = vmatpush2.msra.mxu0 0.0
    %198 = vmatprep.subr.mxu0 0.0
    %199 = vmatpush2.msra.mxu0 0.0
    %200 = vmatprep.subr.mxu0 0.0
    %201 = vmatpush2.msra.mxu0 0.0
    %202 = vmatprep.mubr.f32.mxu0 0.0
    %203 = vmatmul.mubr.f32.gmra.mxu0 %v133
    %v204 = vpop.f32.mrf.mxu0
    %v205 = vadd.f32 0.0, %v204
    %v206 = vpop.f32.mrf.mxu0
    %207 = vmatprep.mubr.f32.mxu0 0.0
    %208 = vmatmul.mubr.f32.gmra.mxu0 %v136
    %v209 = vpop.f32.mrf.mxu0
    %v210 = vadd.f32 0.0, %v209
    %v211 = vpop.f32.mrf.mxu0
    %212 = vdwg.mxu0
    %v213 = vlaneseq
    %v214 = vshrl.u32 %v213, 7
    %v215 = vsub.s32 0, %v214
    %v216 = vrot.slane %v93, %v215
    %v217 = vadd.f32 %v205, %v216
    %v218 = vadd.f32 %v210, %v216
    %v219 = vlaneseq
    %v220 = vshrl.u32 %v219, 7
    %v221 = vsub.s32 1, %v220
    %v222 = vrot.slane %v93, %v221
    %224 = vrot.lane.b32.xlu0 %v222, 32
    %v225 = vpop.permute.xlu0 %224
    %v227 = vadd.f32 %v205, %v225
    %v228 = vadd.f32 %v210, %v225
    %v229 = vlaneseq
    %v230 = vshrl.u32 %v229, 7
    %v231 = vsub.s32 2, %v230
    %v232 = vrot.slane %v93, %v231
    %234 = vrot.lane.b32.xlu0 %v232, 64
    %v235 = vpop.permute.xlu0 %234
    %v237 = vadd.f32 %v205, %v235
    %v238 = vadd.f32 %v210, %v235
    %241 = vrot.lane.b32.xlu0 %v217, 120
    %v242 = vpop.permute.xlu0 %241
    %243 = vrot.lane.b32.xlu0 %v218, 120
    %v244 = vpop.permute.xlu0 %243
    %245 = vrot.lane.b32.xlu0 %v217, 112
    %v246 = vpop.permute.xlu0 %245
    %247 = vrot.lane.b32.xlu0 %v218, 112
    %v248 = vpop.permute.xlu0 %247
    %249 = vrot.lane.b32.xlu0 %v217, 104
    %v250 = vpop.permute.xlu0 %249
    %251 = vrot.lane.b32.xlu0 %v218, 104
    %v252 = vpop.permute.xlu0 %251
    %255 = vrot.lane.b32.xlu0 %v227, 120
    %v256 = vpop.permute.xlu0 %255
    %257 = vrot.lane.b32.xlu0 %v228, 120
    %v258 = vpop.permute.xlu0 %257
    %259 = vrot.lane.b32.xlu0 %v227, 112
    %v260 = vpop.permute.xlu0 %259
    %261 = vrot.lane.b32.xlu0 %v228, 112
    %v262 = vpop.permute.xlu0 %261
    %263 = vrot.lane.b32.xlu0 %v227, 104
    %v264 = vpop.permute.xlu0 %263
    %265 = vrot.lane.b32.xlu0 %v228, 104
    %v266 = vpop.permute.xlu0 %265
    %269 = vrot.lane.b32.xlu0 %v237, 120
    %v270 = vpop.permute.xlu0 %269
    %271 = vrot.lane.b32.xlu0 %v238, 120
    %v272 = vpop.permute.xlu0 %271
    %273 = vrot.lane.b32.xlu0 %v237, 112
    %v274 = vpop.permute.xlu0 %273
    %275 = vrot.lane.b32.xlu0 %v238, 112
    %v276 = vpop.permute.xlu0 %275
    %277 = vrot.lane.b32.xlu0 %v237, 104
    %v278 = vpop.permute.xlu0 %277
    %279 = vrot.lane.b32.xlu0 %v238, 104
    %v280 = vpop.permute.xlu0 %279
    %281 = vrot.lane.b32.xlu0 %v227, 96
    %v282 = vpop.permute.xlu0 %281
    %283 = vrot.lane.b32.xlu0 %v228, 96
    %v284 = vpop.permute.xlu0 %283
    %285 = vrot.lane.b32.xlu0 %v256, 96
    %v286 = vpop.permute.xlu0 %285
    %287 = vrot.lane.b32.xlu0 %v258, 96
    %v288 = vpop.permute.xlu0 %287
    %289 = vrot.lane.b32.xlu0 %v260, 96
    %v290 = vpop.permute.xlu0 %289
    %291 = vrot.lane.b32.xlu0 %v262, 96
    %v292 = vpop.permute.xlu0 %291
    %293 = vrot.lane.b32.xlu0 %v264, 96
    %v294 = vpop.permute.xlu0 %293
    %295 = vrot.lane.b32.xlu0 %v266, 96
    %v296 = vpop.permute.xlu0 %295
    %vm297 = vcmask 64512
    %v298 = vsel %vm297, %v217, 0
    %v300 = vsel %vm297, %v218, 0
    %v302 = vsel %vm297, %v242, 0
    %v304 = vsel %vm297, %v244, 0
    %v306 = vsel %vm297, %v246, 0
    %v308 = vsel %vm297, %v248, 0
    %v310 = vsel %vm297, %v250, 0
    %v312 = vsel %vm297, %v252, 0
    %v314 = vsel %vm297, %v282, 0
    %v316 = vsel %vm297, %v284, 0
    %v318 = vsel %vm297, %v286, 0
    %v320 = vsel %vm297, %v288, 0
    %v322 = vsel %vm297, %v290, 0
    %v324 = vsel %vm297, %v292, 0
    %v326 = vsel %vm297, %v294, 0
    %v328 = vsel %vm297, %v296, 0
    %330 = vmatprep.subr.mxu0 0.0
    %331 = vmatpush1.xpose.msra.mxu0 0.0
    %332 = vmatprep.subr.mxu0 0.0
    %333 = vmatpush1.xpose.msra.mxu0 0.0
    %334 = vmatprep.subr.mxu0 0.0
    %335 = vmatpush1.xpose.msra.mxu0 0.0
    %336 = vmatprep.subr.mxu0 0.0
    %337 = vmatpush1.xpose.msra.mxu0 0.0
    %338 = vmatprep.subr.mxu0 0.0
    %339 = vmatpush1.xpose.msra.mxu0 0.0
    %340 = vmatprep.subr.mxu0 0.0
    %341 = vmatpush1.xpose.msra.mxu0 0.0
    %342 = vmatprep.subr.mxu0 0.0
    %343 = vmatpush1.xpose.msra.mxu0 0.0
    %344 = vmatprep.subr.mxu0 0.0
    %345 = vmatpush1.xpose.msra.mxu0 0.0
    %346 = vmatprep.subr.mxu0 0.0
    %347 = vmatpush1.xpose.msra.mxu0 %v328
    %348 = vmatprep.subr.mxu0 0.0
    %349 = vmatpush1.xpose.msra.mxu0 %v326
    %350 = vmatprep.subr.mxu0 0.0
    %351 = vmatpush1.xpose.msra.mxu0 %v324
    %352 = vmatprep.subr.mxu0 0.0
    %353 = vmatpush1.xpose.msra.mxu0 %v322
    %354 = vmatprep.subr.mxu0 0.0
    %355 = vmatpush1.xpose.msra.mxu0 %v320
    %356 = vmatprep.subr.mxu0 0.0
    %357 = vmatpush1.xpose.msra.mxu0 %v318
    %358 = vmatprep.subr.mxu0 0.0
    %359 = vmatpush1.xpose.msra.mxu0 %v316
    %360 = vmatprep.subr.mxu0 0.0
    %361 = vmatpush1.xpose.msra.mxu0 %v314
    %362 = vmatprep.subr.mxu0 0.0
    %363 = vmatpush2.xpose.msra.mxu0 0.0
    %364 = vmatprep.subr.mxu0 0.0
    %365 = vmatpush2.xpose.msra.mxu0 0.0
    %366 = vmatprep.subr.mxu0 0.0
    %367 = vmatpush2.xpose.msra.mxu0 0.0
    %368 = vmatprep.subr.mxu0 0.0
    %369 = vmatpush2.xpose.msra.mxu0 0.0
    %370 = vmatprep.subr.mxu0 0.0
    %371 = vmatpush2.xpose.msra.mxu0 0.0
    %372 = vmatprep.subr.mxu0 0.0
    %373 = vmatpush2.xpose.msra.mxu0 0.0
    %374 = vmatprep.subr.mxu0 0.0
    %375 = vmatpush2.xpose.msra.mxu0 0.0
    %376 = vmatprep.subr.mxu0 0.0
    %377 = vmatpush2.xpose.msra.mxu0 0.0
    %378 = vmatprep.subr.mxu0 0.0
    %379 = vmatpush2.xpose.msra.mxu0 0.0
    %380 = vmatprep.subr.mxu0 0.0
    %381 = vmatpush2.xpose.msra.mxu0 0.0
    %382 = vmatprep.subr.mxu0 0.0
    %383 = vmatpush2.xpose.msra.mxu0 0.0
    %384 = vmatprep.subr.mxu0 0.0
    %385 = vmatpush2.xpose.msra.mxu0 0.0
    %386 = vmatprep.subr.mxu0 0.0
    %387 = vmatpush2.xpose.msra.mxu0 0.0
    %388 = vmatprep.subr.mxu0 0.0
    %389 = vmatpush2.xpose.msra.mxu0 0.0
    %390 = vmatprep.subr.mxu0 0.0
    %391 = vmatpush2.xpose.msra.mxu0 0.0
    %392 = vmatprep.subr.mxu0 0.0
    %393 = vmatpush2.xpose.msra.mxu0 0.0
    %394 = vmatprep.mubr.f32.mxu0 0.0
    %395 = vmatmul.mubr.f32.gmra.mxu0 %v298
    %v396 = vpop.f32.mrf.mxu0
    %v397 = vadd.f32 %v123, %v396
    %v398 = vpop.f32.mrf.mxu0
    %399 = vmatprep.mubr.f32.mxu0 0.0
    %400 = vmatmul.mubr.f32.gmra.mxu0 %v300
    %v401 = vpop.f32.mrf.mxu0
    %v402 = vadd.f32 %v124, %v401
    %v403 = vpop.f32.mrf.mxu0
    %404 = vmatprep.mubr.f32.mxu0 0.0
    %405 = vmatmul.mubr.f32.gmra.mxu0 %v302
    %v406 = vpop.f32.mrf.mxu0
    %v407 = vadd.f32 %v125, %v406
    %v408 = vpop.f32.mrf.mxu0
    %409 = vmatprep.mubr.f32.mxu0 0.0
    %410 = vmatmul.mubr.f32.gmra.mxu0 %v304
    %v411 = vpop.f32.mrf.mxu0
    %v412 = vadd.f32 %v126, %v411
    %v413 = vpop.f32.mrf.mxu0
    %414 = vmatprep.mubr.f32.mxu0 0.0
    %415 = vmatmul.mubr.f32.gmra.mxu0 %v306
    %v416 = vpop.f32.mrf.mxu0
    %v417 = vadd.f32 %v127, %v416
    %v418 = vpop.f32.mrf.mxu0
    %419 = vmatprep.mubr.f32.mxu0 0.0
    %420 = vmatmul.mubr.f32.gmra.mxu0 %v308
    %v421 = vpop.f32.mrf.mxu0
    %v422 = vadd.f32 %v128, %v421
    %v423 = vpop.f32.mrf.mxu0
    %424 = vmatprep.mubr.f32.mxu0 0.0
    %425 = vmatmul.mubr.f32.gmra.mxu0 %v310
    %v426 = vpop.f32.mrf.mxu0
    %v427 = vadd.f32 %v129, %v426
    %v428 = vpop.f32.mrf.mxu0
    %429 = vmatprep.mubr.f32.mxu0 0.0
    %430 = vmatmul.mubr.f32.gmra.mxu0 %v312
    %v431 = vpop.f32.mrf.mxu0
    %v432 = vadd.f32 %v130, %v431
    %v433 = vpop.f32.mrf.mxu0
    %434 = vdwg.mxu0
    %vm435 = vcmask 523264
    %v436 = vsel %vm435, %v397, -inf
    %437 = vmax.xlane.f32.xlu0 %v436
    %v438 = vpop.xlane.xlu0 %437
    %v439 = vsel %vm435, %v402, -inf
    %440 = vmax.xlane.f32.xlu0 %v439
    %v441 = vpop.xlane.xlu0 %440
    %v442 = vsel %vm435, %v407, -inf
    %443 = vmax.xlane.f32.xlu0 %v442
    %v444 = vpop.xlane.xlu0 %443
    %v445 = vsel %vm435, %v412, -inf
    %446 = vmax.xlane.f32.xlu0 %v445
    %v447 = vpop.xlane.xlu0 %446
    %v448 = vsel %vm435, %v417, -inf
    %449 = vmax.xlane.f32.xlu0 %v448
    %v450 = vpop.xlane.xlu0 %449
    %v451 = vsel %vm435, %v422, -inf
    %452 = vmax.xlane.f32.xlu0 %v451
    %v453 = vpop.xlane.xlu0 %452
    %v454 = vsel %vm435, %v427, -inf
    %455 = vmax.xlane.f32.xlu0 %v454
    %v456 = vpop.xlane.xlu0 %455
    %v457 = vsel %vm435, %v432, -inf
    %458 = vmax.xlane.f32.xlu0 %v457
    %v459 = vpop.xlane.xlu0 %458
    %v460 = vsub.f32 %v397, %v438
    %v461 = vsub.f32 %v402, %v441
    %v462 = vsub.f32 %v407, %v444
    %v463 = vsub.f32 %v412, %v447
    %v464 = vsub.f32 %v417, %v450
    %v465 = vsub.f32 %v422, %v453
    %v466 = vsub.f32 %v427, %v456
    %v467 = vsub.f32 %v432, %v459
    %v468 = vmul.f32 %v460, 1.442695
    %v469 = vpow.pop %v468
    %v470 = vmul.f32 %v461, 1.442695
    %v471 = vpow.pop %v470
    %v472 = vmul.f32 %v462, 1.442695
    %v473 = vpow.pop %v472
    %v474 = vmul.f32 %v463, 1.442695
    %v475 = vpow.pop %v474
    %v476 = vmul.f32 %v464, 1.442695
    %v477 = vpow.pop %v476
    %v478 = vmul.f32 %v465, 1.442695
    %v479 = vpow.pop %v478
    %v480 = vmul.f32 %v466, 1.442695
    %v481 = vpow.pop %v480
    %v482 = vmul.f32 %v467, 1.442695
    %v483 = vpow.pop %v482
    %v484 = vsel %vm435, %v469, 0.0
    %485 = vadd.xlane.f32.xlu0 %v484
    %v486 = vpop.xlane.xlu0 %485
    %v487 = vsel %vm435, %v471, 0.0
    %488 = vadd.xlane.f32.xlu0 %v487
    %v489 = vpop.xlane.xlu0 %488
    %v490 = vsel %vm435, %v473, 0.0
    %491 = vadd.xlane.f32.xlu0 %v490
    %v492 = vpop.xlane.xlu0 %491
    %v493 = vsel %vm435, %v475, 0.0
    %494 = vadd.xlane.f32.xlu0 %v493
    %v495 = vpop.xlane.xlu0 %494
    %v496 = vsel %vm435, %v477, 0.0
    %497 = vadd.xlane.f32.xlu0 %v496
    %v498 = vpop.xlane.xlu0 %497
    %v499 = vsel %vm435, %v479, 0.0
    %500 = vadd.xlane.f32.xlu0 %v499
    %v501 = vpop.xlane.xlu0 %500
    %v502 = vsel %vm435, %v481, 0.0
    %503 = vadd.xlane.f32.xlu0 %v502
    %v504 = vpop.xlane.xlu0 %503
    %v505 = vsel %vm435, %v483, 0.0
    %506 = vadd.xlane.f32.xlu0 %v505
    %v507 = vpop.xlane.xlu0 %506
    %v508 = vrcp.pop %v486
    %v509 = vmul.f32 %v469, %v508
    %v510 = vrcp.pop %v489
    %v511 = vmul.f32 %v471, %v510
    %v512 = vrcp.pop %v492
    %v513 = vmul.f32 %v473, %v512
    %v514 = vrcp.pop %v495
    %v515 = vmul.f32 %v475, %v514
    %v516 = vrcp.pop %v498
    %v517 = vmul.f32 %v477, %v516
    %v518 = vrcp.pop %v501
    %v519 = vmul.f32 %v479, %v518
    %v520 = vrcp.pop %v504
    %v521 = vmul.f32 %v481, %v520
    %v522 = vrcp.pop %v507
    %v523 = vmul.f32 %v483, %v522
    %524 = vrot.lane.b32.xlu0 %v237, 64
    %v525 = vpop.permute.xlu0 %524
    %526 = vrot.lane.b32.xlu0 %v238, 64
    %v527 = vpop.permute.xlu0 %526
    %528 = vrot.lane.b32.xlu0 %v270, 64
    %v529 = vpop.permute.xlu0 %528
    %530 = vrot.lane.b32.xlu0 %v272, 64
    %v531 = vpop.permute.xlu0 %530
    %532 = vrot.lane.b32.xlu0 %v274, 64
    %v533 = vpop.permute.xlu0 %532
    %534 = vrot.lane.b32.xlu0 %v276, 64
    %v535 = vpop.permute.xlu0 %534
    %536 = vrot.lane.b32.xlu0 %v278, 64
    %v537 = vpop.permute.xlu0 %536
    %538 = vrot.lane.b32.xlu0 %v280, 64
    %v539 = vpop.permute.xlu0 %538
    %v549 = vsel %vm435, %v509, 0
    %v552 = vsel %vm435, %v511, 0
    %v555 = vsel %vm435, %v513, 0
    %v558 = vsel %vm435, %v515, 0
    %v561 = vsel %vm435, %v517, 0
    %v564 = vsel %vm435, %v519, 0
    %v567 = vsel %vm435, %v521, 0
    %v570 = vsel %vm435, %v523, 0
    %572 = vmatprep.subr.mxu0 0.0
    %573 = vmatpush1.msra.mxu0 0.0
    %574 = vmatprep.subr.mxu0 0.0
    %575 = vmatpush1.msra.mxu0 0.0
    %576 = vmatprep.subr.mxu0 0.0
    %577 = vmatpush1.msra.mxu0 0.0
    %578 = vmatprep.subr.mxu0 0.0
    %579 = vmatpush1.msra.mxu0 0.0
    %580 = vmatprep.subr.mxu0 0.0
    %581 = vmatpush1.msra.mxu0 0.0
    %582 = vmatprep.subr.mxu0 0.0
    %583 = vmatpush1.msra.mxu0 0.0
    %584 = vmatprep.subr.mxu0 0.0
    %585 = vmatpush1.msra.mxu0 0.0
    %586 = vmatprep.subr.mxu0 0.0
    %587 = vmatpush1.msra.mxu0 0.0
    %588 = vmatprep.subr.mxu0 0.0
    %589 = vmatpush1.msra.mxu0 %v539
    %590 = vmatprep.subr.mxu0 0.0
    %591 = vmatpush1.msra.mxu0 %v537
    %592 = vmatprep.subr.mxu0 0.0
    %593 = vmatpush1.msra.mxu0 %v535
    %594 = vmatprep.subr.mxu0 0.0
    %595 = vmatpush1.msra.mxu0 %v533
    %596 = vmatprep.subr.mxu0 0.0
    %597 = vmatpush1.msra.mxu0 %v531
    %598 = vmatprep.subr.mxu0 0.0
    %599 = vmatpush1.msra.mxu0 %v529
    %600 = vmatprep.subr.mxu0 0.0
    %601 = vmatpush1.msra.mxu0 %v527
    %602 = vmatprep.subr.mxu0 0.0
    %603 = vmatpush1.msra.mxu0 %v525
    %604 = vmatprep.subr.mxu0 0.0
    %605 = vmatpush2.msra.mxu0 0.0
    %606 = vmatprep.subr.mxu0 0.0
    %607 = vmatpush2.msra.mxu0 0.0
    %608 = vmatprep.subr.mxu0 0.0
    %609 = vmatpush2.msra.mxu0 0.0
    %610 = vmatprep.subr.mxu0 0.0
    %611 = vmatpush2.msra.mxu0 0.0
    %612 = vmatprep.subr.mxu0 0.0
    %613 = vmatpush2.msra.mxu0 0.0
    %614 = vmatprep.subr.mxu0 0.0
    %615 = vmatpush2.msra.mxu0 0.0
    %616 = vmatprep.subr.mxu0 0.0
    %617 = vmatpush2.msra.mxu0 0.0
    %618 = vmatprep.subr.mxu0 0.0
    %619 = vmatpush2.msra.mxu0 0.0
    %620 = vmatprep.subr.mxu0 0.0
    %621 = vmatpush2.msra.mxu0 0.0
    %622 = vmatprep.subr.mxu0 0.0
    %623 = vmatpush2.msra.mxu0 0.0
    %624 = vmatprep.subr.mxu0 0.0
    %625 = vmatpush2.msra.mxu0 0.0
    %626 = vmatprep.subr.mxu0 0.0
    %627 = vmatpush2.msra.mxu0 0.0
    %628 = vmatprep.subr.mxu0 0.0
    %629 = vmatpush2.msra.mxu0 0.0
    %630 = vmatprep.subr.mxu0 0.0
    %631 = vmatpush2.msra.mxu0 0.0
    %632 = vmatprep.subr.mxu0 0.0
    %633 = vmatpush2.msra.mxu0 0.0
    %634 = vmatprep.subr.mxu0 0.0
    %635 = vmatpush2.msra.mxu0 0.0
    %636 = vmatprep.mubr.f32.mxu0 0.0
    %637 = vmatmul.mubr.f32.gmra.mxu0 %v549
    %v638 = vpop.f32.mrf.mxu0
    %v639 = vadd.f32 0.0, %v638
    %v640 = vpop.f32.mrf.mxu0
    %641 = vmatprep.mubr.f32.mxu0 0.0
    %642 = vmatmul.mubr.f32.gmra.mxu0 %v552
    %v643 = vpop.f32.mrf.mxu0
    %v644 = vadd.f32 0.0, %v643
    %v645 = vpop.f32.mrf.mxu0
    %646 = vmatprep.mubr.f32.mxu0 0.0
    %647 = vmatmul.mubr.f32.gmra.mxu0 %v555
    %v648 = vpop.f32.mrf.mxu0
    %v649 = vadd.f32 0.0, %v648
    %v650 = vpop.f32.mrf.mxu0
    %651 = vmatprep.mubr.f32.mxu0 0.0
    %652 = vmatmul.mubr.f32.gmra.mxu0 %v558
    %v653 = vpop.f32.mrf.mxu0
    %v654 = vadd.f32 0.0, %v653
    %v655 = vpop.f32.mrf.mxu0
    %656 = vmatprep.mubr.f32.mxu0 0.0
    %657 = vmatmul.mubr.f32.gmra.mxu0 %v561
    %v658 = vpop.f32.mrf.mxu0
    %v659 = vadd.f32 0.0, %v658
    %v660 = vpop.f32.mrf.mxu0
    %661 = vmatprep.mubr.f32.mxu0 0.0
    %662 = vmatmul.mubr.f32.gmra.mxu0 %v564
    %v663 = vpop.f32.mrf.mxu0
    %v664 = vadd.f32 0.0, %v663
    %v665 = vpop.f32.mrf.mxu0
    %666 = vmatprep.mubr.f32.mxu0 0.0
    %667 = vmatmul.mubr.f32.gmra.mxu0 %v567
    %v668 = vpop.f32.mrf.mxu0
    %v669 = vadd.f32 0.0, %v668
    %v670 = vpop.f32.mrf.mxu0
    %671 = vmatprep.mubr.f32.mxu0 0.0
    %672 = vmatmul.mubr.f32.gmra.mxu0 %v570
    %v673 = vpop.f32.mrf.mxu0
    %v674 = vadd.f32 0.0, %v673
    %v675 = vpop.f32.mrf.mxu0
    %676 = vdwg.mxu0
    %679 = vrot.lane.b32.xlu0 %v649, 8
    %v680 = vpop.permute.xlu0 %679
    %681 = vrot.lane.b32.xlu0 %v654, 8
    %v682 = vpop.permute.xlu0 %681
    %687 = vrot.lane.b32.xlu0 %v659, 16
    %v688 = vpop.permute.xlu0 %687
    %689 = vrot.lane.b32.xlu0 %v664, 16
    %v690 = vpop.permute.xlu0 %689
    %695 = vrot.lane.b32.xlu0 %v669, 24
    %v696 = vpop.permute.xlu0 %695
    %697 = vrot.lane.b32.xlu0 %v674, 24
    %v698 = vpop.permute.xlu0 %697
    %v701 = vsel %vm297, %v639, %v680
    %v702 = vsel %vm297, %v644, %v682
    %vm703 = vcmask 130048
    %v704 = vsel %vm703, %v701, %v688
    %v705 = vsel %vm703, %v702, %v690
    %vm706 = vcmask 195584
    %v707 = vsel %vm706, %v704, %v696
    %v708 = vsel %vm706, %v705, %v698
    %v709 = vlaneseq
    %v710 = vshrl.u32 %v709, 7
    %v711 = vsub.s32 3, %v710
    %v712 = vrot.slane %v93, %v711
    %717 = vrot.lane.b32.xlu0 %v77, 32
    %v718 = vpop.permute.xlu0 %717
    %719 = vrot.lane.b32.xlu0 %v81, 32
    %v720 = vpop.permute.xlu0 %719
    %721 = vrot.lane.b32.xlu0 %v85, 32
    %v722 = vpop.permute.xlu0 %721
    %723 = vrot.lane.b32.xlu0 %v89, 32
    %v724 = vpop.permute.xlu0 %723
    %v730 = vsel %vm131, %v707, 0
    %v733 = vsel %vm131, %v708, 0
    %735 = vmatprep.subr.mxu0 0.0
    %736 = vmatpush1.msra.mxu0 0.0
    %737 = vmatprep.subr.mxu0 0.0
    %738 = vmatpush1.msra.mxu0 0.0
    %739 = vmatprep.subr.mxu0 0.0
    %740 = vmatpush1.msra.mxu0 0.0
    %741 = vmatprep.subr.mxu0 0.0
    %742 = vmatpush1.msra.mxu0 0.0
    %743 = vmatprep.subr.mxu0 0.0
    %744 = vmatpush1.msra.mxu0 0.0
    %745 = vmatprep.subr.mxu0 0.0
    %746 = vmatpush1.msra.mxu0 0.0
    %747 = vmatprep.subr.mxu0 0.0
    %748 = vmatpush1.msra.mxu0 0.0
    %749 = vmatprep.subr.mxu0 0.0
    %750 = vmatpush1.msra.mxu0 0.0
    %751 = vmatprep.subr.mxu0 0.0
    %752 = vmatpush1.msra.mxu0 0.0
    %753 = vmatprep.subr.mxu0 0.0
    %754 = vmatpush1.msra.mxu0 0.0
    %755 = vmatprep.subr.mxu0 0.0
    %756 = vmatpush1.msra.mxu0 0.0
    %757 = vmatprep.subr.mxu0 0.0
    %758 = vmatpush1.msra.mxu0 0.0
    %759 = vmatprep.subr.mxu0 0.0
    %760 = vmatpush1.msra.mxu0 %v724
    %761 = vmatprep.subr.mxu0 0.0
    %762 = vmatpush1.msra.mxu0 %v722
    %763 = vmatprep.subr.mxu0 0.0
    %764 = vmatpush1.msra.mxu0 %v720
    %765 = vmatprep.subr.mxu0 0.0
    %766 = vmatpush1.msra.mxu0 %v718
    %767 = vmatprep.subr.mxu0 0.0
    %768 = vmatpush2.msra.mxu0 0.0
    %769 = vmatprep.subr.mxu0 0.0
    %770 = vmatpush2.msra.mxu0 0.0
    %771 = vmatprep.subr.mxu0 0.0
    %772 = vmatpush2.msra.mxu0 0.0
    %773 = vmatprep.subr.mxu0 0.0
    %774 = vmatpush2.msra.mxu0 0.0
    %775 = vmatprep.subr.mxu0 0.0
    %776 = vmatpush2.msra.mxu0 0.0
    %777 = vmatprep.subr.mxu0 0.0
    %778 = vmatpush2.msra.mxu0 0.0
    %779 = vmatprep.subr.mxu0 0.0
    %780 = vmatpush2.msra.mxu0 0.0
    %781 = vmatprep.subr.mxu0 0.0
    %782 = vmatpush2.msra.mxu0 0.0
    %783 = vmatprep.subr.mxu0 0.0
    %784 = vmatpush2.msra.mxu0 0.0
    %785 = vmatprep.subr.mxu0 0.0
    %786 = vmatpush2.msra.mxu0 0.0
    %787 = vmatprep.subr.mxu0 0.0
    %788 = vmatpush2.msra.mxu0 0.0
    %789 = vmatprep.subr.mxu0 0.0
    %790 = vmatpush2.msra.mxu0 0.0
    %791 = vmatprep.subr.mxu0 0.0
    %792 = vmatpush2.msra.mxu0 0.0
    %793 = vmatprep.subr.mxu0 0.0
    %794 = vmatpush2.msra.mxu0 0.0
    %795 = vmatprep.subr.mxu0 0.0
    %796 = vmatpush2.msra.mxu0 0.0
    %797 = vmatprep.subr.mxu0 0.0
    %798 = vmatpush2.msra.mxu0 0.0
    %799 = vmatprep.mubr.f32.mxu0 0.0
    %800 = vmatmul.mubr.f32.gmra.mxu0 %v730
    %v801 = vpop.f32.mrf.mxu0
    %v802 = vadd.f32 %v712, %v801
    %v803 = vpop.f32.mrf.mxu0
    %804 = vmatprep.mubr.f32.mxu0 0.0
    %805 = vmatmul.mubr.f32.gmra.mxu0 %v733
    %v806 = vpop.f32.mrf.mxu0
    %v807 = vadd.f32 %v712, %v806
    %v808 = vpop.f32.mrf.mxu0
    %809 = vdwg.mxu0
    %v810 = vadd.f32 %v73, %v802
    %v811 = vadd.f32 %v74, %v807
    %v812 = vsel %vm131, %v810, 0.0
    %813 = vadd.xlane.f32.xlu0 %v812
    %v814 = vpop.xlane.xlu0 %813
    %v815 = vsel %vm131, %v811, 0.0
    %816 = vadd.xlane.f32.xlu0 %v815
    %v817 = vpop.xlane.xlu0 %816
    %v818 = vrcp.pop 32.0
    %v819 = vmul.f32 %v814, %v818
    %v820 = vmul.f32 %v817, %v818
    %v821 = vsub.f32 %v810, %v819
    %v822 = vsub.f32 %v811, %v820
    %v823 = vmul.f32 %v821, %v821
    %v824 = vmul.f32 %v822, %v822
    %v825 = vsel %vm131, %v823, 0.0
    %826 = vadd.xlane.f32.xlu0 %v825
    %v827 = vpop.xlane.xlu0 %826
    %v828 = vsel %vm131, %v824, 0.0
    %829 = vadd.xlane.f32.xlu0 %v828
    %v830 = vpop.xlane.xlu0 %829
    %v831 = vmul.f32 %v827, %v818
    %v832 = vmul.f32 %v830, %v818
    %v833 = vadd.f32 %v831, 1e-05
    %v834 = vadd.f32 %v832, 1e-05
    %v835 = vrsqrt.pop %v833
    %v836 = vrsqrt.pop %v834
    %v837 = vmul.f32 %v821, %v835
    %v838 = vmul.f32 %v822, %v836
    %v839 = vlaneseq
    %v840 = vshrl.u32 %v839, 7
    %v841 = vsub.s32 1, %v840
    %v842 = vrot.slane %v94, %v841
    %v843 = vmul.f32 %v837, %v842
    %v844 = vmul.f32 %v838, %v842
    %v845 = vlaneseq
    %v846 = vshrl.u32 %v845, 7
    %v847 = vsub.s32 2, %v846
    %v848 = vrot.slane %v94, %v847
    %v849 = vadd.f32 %v843, %v848
    %v850 = vadd.f32 %v844, %v848
    %v851 = vlaneseq
    %v852 = vshrl.u32 %v851, 7
    %v853 = vsub.s32 4, %v852
    %v854 = vrot.slane %v93, %v853
    %v856 = vsel %vm131, %v849, 0
    %v859 = vsel %vm131, %v850, 0
    %861 = vmatprep.subr.mxu0 0.0
    %862 = vmatpush1.msra.mxu0 0.0
    %863 = vmatprep.subr.mxu0 0.0
    %864 = vmatpush1.msra.mxu0 0.0
    %865 = vmatprep.subr.mxu0 0.0
    %866 = vmatpush1.msra.mxu0 0.0
    %867 = vmatprep.subr.mxu0 0.0
    %868 = vmatpush1.msra.mxu0 0.0
    %869 = vmatprep.subr.mxu0 0.0
    %870 = vmatpush1.msra.mxu0 0.0
    %871 = vmatprep.subr.mxu0 0.0
    %872 = vmatpush1.msra.mxu0 0.0
    %873 = vmatprep.subr.mxu0 0.0
    %874 = vmatpush1.msra.mxu0 0.0
    %875 = vmatprep.subr.mxu0 0.0
    %876 = vmatpush1.msra.mxu0 0.0
    %877 = vmatprep.subr.mxu0 0.0
    %878 = vmatpush1.msra.mxu0 0.0
    %879 = vmatprep.subr.mxu0 0.0
    %880 = vmatpush1.msra.mxu0 0.0
    %881 = vmatprep.subr.mxu0 0.0
    %882 = vmatpush1.msra.mxu0 0.0
    %883 = vmatprep.subr.mxu0 0.0
    %884 = vmatpush1.msra.mxu0 0.0
    %885 = vmatprep.subr.mxu0 0.0
    %886 = vmatpush1.msra.mxu0 %v90
    %887 = vmatprep.subr.mxu0 0.0
    %888 = vmatpush1.msra.mxu0 %v86
    %889 = vmatprep.subr.mxu0 0.0
    %890 = vmatpush1.msra.mxu0 %v82
    %891 = vmatprep.subr.mxu0 0.0
    %892 = vmatpush1.msra.mxu0 %v78
    %893 = vmatprep.subr.mxu0 0.0
    %894 = vmatpush2.msra.mxu0 0.0
    %895 = vmatprep.subr.mxu0 0.0
    %896 = vmatpush2.msra.mxu0 0.0
    %897 = vmatprep.subr.mxu0 0.0
    %898 = vmatpush2.msra.mxu0 0.0
    %899 = vmatprep.subr.mxu0 0.0
    %900 = vmatpush2.msra.mxu0 0.0
    %901 = vmatprep.subr.mxu0 0.0
    %902 = vmatpush2.msra.mxu0 0.0
    %903 = vmatprep.subr.mxu0 0.0
    %904 = vmatpush2.msra.mxu0 0.0
    %905 = vmatprep.subr.mxu0 0.0
    %906 = vmatpush2.msra.mxu0 0.0
    %907 = vmatprep.subr.mxu0 0.0
    %908 = vmatpush2.msra.mxu0 0.0
    %909 = vmatprep.subr.mxu0 0.0
    %910 = vmatpush2.msra.mxu0 0.0
    %911 = vmatprep.subr.mxu0 0.0
    %912 = vmatpush2.msra.mxu0 0.0
    %913 = vmatprep.subr.mxu0 0.0
    %914 = vmatpush2.msra.mxu0 0.0
    %915 = vmatprep.subr.mxu0 0.0
    %916 = vmatpush2.msra.mxu0 0.0
    %917 = vmatprep.subr.mxu0 0.0
    %918 = vmatpush2.msra.mxu0 0.0
    %919 = vmatprep.subr.mxu0 0.0
    %920 = vmatpush2.msra.mxu0 0.0
    %921 = vmatprep.subr.mxu0 0.0
    %922 = vmatpush2.msra.mxu0 0.0
    %923 = vmatprep.subr.mxu0 0.0
    %924 = vmatpush2.msra.mxu0 0.0
    %925 = vmatprep.mubr.f32.mxu0 0.0
    %926 = vmatmul.mubr.f32.gmra.mxu0 %v856
    %v927 = vpop.f32.mrf.mxu0
    %v928 = vadd.f32 %v854, %v927
    %v929 = vpop.f32.mrf.mxu0
    %930 = vmatprep.mubr.f32.mxu0 0.0
    %931 = vmatmul.mubr.f32.gmra.mxu0 %v859
    %v932 = vpop.f32.mrf.mxu0
    %v933 = vadd.f32 %v854, %v932
    %v934 = vpop.f32.mrf.mxu0
    %935 = vdwg.mxu0
    %940 = vrot.lane.b32.xlu0 %v78, 96
    %v941 = vpop.permute.xlu0 %940
    %942 = vrot.lane.b32.xlu0 %v82, 96
    %v943 = vpop.permute.xlu0 %942
    %944 = vrot.lane.b32.xlu0 %v86, 96
    %v945 = vpop.permute.xlu0 %944
    %946 = vrot.lane.b32.xlu0 %v90, 96
    %v947 = vpop.permute.xlu0 %946
    %v953 = vsel %vm131, %v75, 0
    %v956 = vsel %vm131, %v76, 0
    %958 = vmatprep.subr.mxu0 0.0
    %959 = vmatpush1.msra.mxu0 0.0
    %960 = vmatprep.subr.mxu0 0.0
    %961 = vmatpush1.msra.mxu0 0.0
    %962 = vmatprep.subr.mxu0 0.0
    %963 = vmatpush1.msra.mxu0 0.0
    %964 = vmatprep.subr.mxu0 0.0
    %965 = vmatpush1.msra.mxu0 0.0
    %966 = vmatprep.subr.mxu0 0.0
    %967 = vmatpush1.msra.mxu0 0.0
    %968 = vmatprep.subr.mxu0 0.0
    %969 = vmatpush1.msra.mxu0 0.0
    %970 = vmatprep.subr.mxu0 0.0
    %971 = vmatpush1.msra.mxu0 0.0
    %972 = vmatprep.subr.mxu0 0.0
    %973 = vmatpush1.msra.mxu0 0.0
    %974 = vmatprep.subr.mxu0 0.0
    %975 = vmatpush1.msra.mxu0 0.0
    %976 = vmatprep.subr.mxu0 0.0
    %977 = vmatpush1.msra.mxu0 0.0
    %978 = vmatprep.subr.mxu0 0.0
    %979 = vmatpush1.msra.mxu0 0.0
    %980 = vmatprep.subr.mxu0 0.0
    %981 = vmatpush1.msra.mxu0 0.0
    %982 = vmatprep.subr.mxu0 0.0
    %983 = vmatpush1.msra.mxu0 %v947
    %984 = vmatprep.subr.mxu0 0.0
    %985 = vmatpush1.msra.mxu0 %v945
    %986 = vmatprep.subr.mxu0 0.0
    %987 = vmatpush1.msra.mxu0 %v943
    %988 = vmatprep.subr.mxu0 0.0
    %989 = vmatpush1.msra.mxu0 %v941
    %990 = vmatprep.subr.mxu0 0.0
    %991 = vmatpush2.msra.mxu0 0.0
    %992 = vmatprep.subr.mxu0 0.0
    %993 = vmatpush2.msra.mxu0 0.0
    %994 = vmatprep.subr.mxu0 0.0
    %995 = vmatpush2.msra.mxu0 0.0
    %996 = vmatprep.subr.mxu0 0.0
    %997 = vmatpush2.msra.mxu0 0.0
    %998 = vmatprep.subr.mxu0 0.0
    %999 = vmatpush2.msra.mxu0 0.0
    %1000 = vmatprep.subr.mxu0 0.0
    %1001 = vmatpush2.msra.mxu0 0.0
    %1002 = vmatprep.subr.mxu0 0.0
    %1003 = vmatpush2.msra.mxu0 0.0
    %1004 = vmatprep.subr.mxu0 0.0
    %1005 = vmatpush2.msra.mxu0 0.0
    %1006 = vmatprep.subr.mxu0 0.0
    %1007 = vmatpush2.msra.mxu0 0.0
    %1008 = vmatprep.subr.mxu0 0.0
    %1009 = vmatpush2.msra.mxu0 0.0
    %1010 = vmatprep.subr.mxu0 0.0
    %1011 = vmatpush2.msra.mxu0 0.0
    %1012 = vmatprep.subr.mxu0 0.0
    %1013 = vmatpush2.msra.mxu0 0.0
    %1014 = vmatprep.subr.mxu0 0.0
    %1015 = vmatpush2.msra.mxu0 0.0
    %1016 = vmatprep.subr.mxu0 0.0
    %1017 = vmatpush2.msra.mxu0 0.0
    %1018 = vmatprep.subr.mxu0 0.0
    %1019 = vmatpush2.msra.mxu0 0.0
    %1020 = vmatprep.subr.mxu0 0.0
    %1021 = vmatpush2.msra.mxu0 0.0
    %1022 = vmatprep.mubr.f32.mxu0 0.0
    %1023 = vmatmul.mubr.f32.gmra.mxu0 %v953
    %v1024 = vpop.f32.mrf.mxu0
    %v1025 = vadd.f32 0.0, %v1024
    %v1026 = vpop.f32.mrf.mxu0
    %1027 = vmatprep.mubr.f32.mxu0 0.0
    %1028 = vmatmul.mubr.f32.gmra.mxu0 %v956
    %v1029 = vpop.f32.mrf.mxu0
    %v1030 = vadd.f32 0.0, %v1029
    %v1031 = vpop.f32.mrf.mxu0
    %1032 = vdwg.mxu0
    %v1033 = vlaneseq
    %v1034 = vshrl.u32 %v1033, 7
    %v1035 = vsub.s32 5, %v1034
    %v1036 = vrot.slane %v93, %v1035
    %v1037 = vadd.f32 %v1025, %v1036
    %v1038 = vadd.f32 %v1030, %v1036
    %v1039 = vlaneseq
    %v1040 = vshrl.u32 %v1039, 7
    %v1041 = vsub.s32 6, %v1040
    %v1042 = vrot.slane %v93, %v1041
    %1044 = vrot.lane.b32.xlu0 %v1042, 32
    %v1045 = vpop.permute.xlu0 %1044
    %v1047 = vadd.f32 %v1025, %v1045
    %v1048 = vadd.f32 %v1030, %v1045
    %1051 = vrot.lane.b32.xlu0 %v928, 120
    %v1052 = vpop.permute.xlu0 %1051
    %1053 = vrot.lane.b32.xlu0 %v933, 120
    %v1054 = vpop.permute.xlu0 %1053
    %1055 = vrot.lane.b32.xlu0 %v928, 112
    %v1056 = vpop.permute.xlu0 %1055
    %1057 = vrot.lane.b32.xlu0 %v933, 112
    %v1058 = vpop.permute.xlu0 %1057
    %1059 = vrot.lane.b32.xlu0 %v928, 104
    %v1060 = vpop.permute.xlu0 %1059
    %1061 = vrot.lane.b32.xlu0 %v933, 104
    %v1062 = vpop.permute.xlu0 %1061
    %1065 = vrot.lane.b32.xlu0 %v1037, 120
    %v1066 = vpop.permute.xlu0 %1065
    %1067 = vrot.lane.b32.xlu0 %v1038, 120
    %v1068 = vpop.permute.xlu0 %1067
    %1069 = vrot.lane.b32.xlu0 %v1037, 112
    %v1070 = vpop.permute.xlu0 %1069
    %1071 = vrot.lane.b32.xlu0 %v1038, 112
    %v1072 = vpop.permute.xlu0 %1071
    %1073 = vrot.lane.b32.xlu0 %v1037, 104
    %v1074 = vpop.permute.xlu0 %1073
    %1075 = vrot.lane.b32.xlu0 %v1038, 104
    %v1076 = vpop.permute.xlu0 %1075
    %1079 = vrot.lane.b32.xlu0 %v1047, 120
    %v1080 = vpop.permute.xlu0 %1079
    %1081 = vrot.lane.b32.xlu0 %v1048, 120
    %v1082 = vpop.permute.xlu0 %1081
    %1083 = vrot.lane.b32.xlu0 %v1047, 112
    %v1084 = vpop.permute.xlu0 %1083
    %1085 = vrot.lane.b32.xlu0 %v1048, 112
    %v1086 = vpop.permute.xlu0 %1085
    %1087 = vrot.lane.b32.xlu0 %v1047, 104
    %v1088 = vpop.permute.xlu0 %1087
    %1089 = vrot.lane.b32.xlu0 %v1048, 104
    %v1090 = vpop.permute.xlu0 %1089
    %v1091 = vsel %vm297, %v928, 0
    %v1093 = vsel %vm297, %v933, 0
    %v1095 = vsel %vm297, %v1052, 0
    %v1097 = vsel %vm297, %v1054, 0
    %v1099 = vsel %vm297, %v1056, 0
    %v1101 = vsel %vm297, %v1058, 0
    %v1103 = vsel %vm297, %v1060, 0
    %v1105 = vsel %vm297, %v1062, 0
    %v1107 = vsel %vm297, %v1037, 0
    %v1109 = vsel %vm297, %v1038, 0
    %v1111 = vsel %vm297, %v1066, 0
    %v1113 = vsel %vm297, %v1068, 0
    %v1115 = vsel %vm297, %v1070, 0
    %v1117 = vsel %vm297, %v1072, 0
    %v1119 = vsel %vm297, %v1074, 0
    %v1121 = vsel %vm297, %v1076, 0
    %1123 = vmatprep.subr.mxu0 0.0
    %1124 = vmatpush1.xpose.msra.mxu0 0.0
    %1125 = vmatprep.subr.mxu0 0.0
    %1126 = vmatpush1.xpose.msra.mxu0 0.0
    %1127 = vmatprep.subr.mxu0 0.0
    %1128 = vmatpush1.xpose.msra.mxu0 0.0
    %1129 = vmatprep.subr.mxu0 0.0
    %1130 = vmatpush1.xpose.msra.mxu0 0.0
    %1131 = vmatprep.subr.mxu0 0.0
    %1132 = vmatpush1.xpose.msra.mxu0 0.0
    %1133 = vmatprep.subr.mxu0 0.0
    %1134 = vmatpush1.xpose.msra.mxu0 0.0
    %1135 = vmatprep.subr.mxu0 0.0
    %1136 = vmatpush1.xpose.msra.mxu0 0.0
    %1137 = vmatprep.subr.mxu0 0.0
    %1138 = vmatpush1.xpose.msra.mxu0 0.0
    %1139 = vmatprep.subr.mxu0 0.0
    %1140 = vmatpush1.xpose.msra.mxu0 %v1121
    %1141 = vmatprep.subr.mxu0 0.0
    %1142 = vmatpush1.xpose.msra.mxu0 %v1119
    %1143 = vmatprep.subr.mxu0 0.0
    %1144 = vmatpush1.xpose.msra.mxu0 %v1117
    %1145 = vmatprep.subr.mxu0 0.0
    %1146 = vmatpush1.xpose.msra.mxu0 %v1115
    %1147 = vmatprep.subr.mxu0 0.0
    %1148 = vmatpush1.xpose.msra.mxu0 %v1113
    %1149 = vmatprep.subr.mxu0 0.0
    %1150 = vmatpush1.xpose.msra.mxu0 %v1111
    %1151 = vmatprep.subr.mxu0 0.0
    %1152 = vmatpush1.xpose.msra.mxu0 %v1109
    %1153 = vmatprep.subr.mxu0 0.0
    %1154 = vmatpush1.xpose.msra.mxu0 %v1107
    %1155 = vmatprep.subr.mxu0 0.0
    %1156 = vmatpush2.xpose.msra.mxu0 0.0
    %1157 = vmatprep.subr.mxu0 0.0
    %1158 = vmatpush2.xpose.msra.mxu0 0.0
    %1159 = vmatprep.subr.mxu0 0.0
    %1160 = vmatpush2.xpose.msra.mxu0 0.0
    %1161 = vmatprep.subr.mxu0 0.0
    %1162 = vmatpush2.xpose.msra.mxu0 0.0
    %1163 = vmatprep.subr.mxu0 0.0
    %1164 = vmatpush2.xpose.msra.mxu0 0.0
    %1165 = vmatprep.subr.mxu0 0.0
    %1166 = vmatpush2.xpose.msra.mxu0 0.0
    %1167 = vmatprep.subr.mxu0 0.0
    %1168 = vmatpush2.xpose.msra.mxu0 0.0
    %1169 = vmatprep.subr.mxu0 0.0
    %1170 = vmatpush2.xpose.msra.mxu0 0.0
    %1171 = vmatprep.subr.mxu0 0.0
    %1172 = vmatpush2.xpose.msra.mxu0 0.0
    %1173 = vmatprep.subr.mxu0 0.0
    %1174 = vmatpush2.xpose.msra.mxu0 0.0
    %1175 = vmatprep.subr.mxu0 0.0
    %1176 = vmatpush2.xpose.msra.mxu0 0.0
    %1177 = vmatprep.subr.mxu0 0.0
    %1178 = vmatpush2.xpose.msra.mxu0 0.0
    %1179 = vmatprep.subr.mxu0 0.0
    %1180 = vmatpush2.xpose.msra.mxu0 0.0
    %1181 = vmatprep.subr.mxu0 0.0
    %1182 = vmatpush2.xpose.msra.mxu0 0.0
    %1183 = vmatprep.subr.mxu0 0.0
    %1184 = vmatpush2.xpose.msra.mxu0 0.0
    %1185 = vmatprep.subr.mxu0 0.0
    %1186 = vmatpush2.xpose.msra.mxu0 0.0
    %1187 = vmatprep.mubr.f32.mxu0 0.0
    %1188 = vmatmul.mubr.f32.gmra.mxu0 %v1091
    %v1189 = vpop.f32.mrf.mxu0
    %v1190 = vadd.f32 %v123, %v1189
    %v1191 = vpop.f32.mrf.mxu0
    %1192 = vmatprep.mubr.f32.mxu0 0.0
    %1193 = vmatmul.mubr.f32.gmra.mxu0 %v1093
    %v1194 = vpop.f32.mrf.mxu0
    %v1195 = vadd.f32 %v124, %v1194
    %v1196 = vpop.f32.mrf.mxu0
    %1197 = vmatprep.mubr.f32.mxu0 0.0
    %1198 = vmatmul.mubr.f32.gmra.mxu0 %v1095
    %v1199 = vpop.f32.mrf.mxu0
    %v1200 = vadd.f32 %v125, %v1199
    %v1201 = vpop.f32.mrf.mxu0
    %1202 = vmatprep.mubr.f32.mxu0 0.0
    %1203 = vmatmul.mubr.f32.gmra.mxu0 %v1097
    %v1204 = vpop.f32.mrf.mxu0
    %v1205 = vadd.f32 %v126, %v1204
    %v1206 = vpop.f32.mrf.mxu0
    %1207 = vmatprep.mubr.f32.mxu0 0.0
    %1208 = vmatmul.mubr.f32.gmra.mxu0 %v1099
    %v1209 = vpop.f32.mrf.mxu0
    %v1210 = vadd.f32 %v127, %v1209
    %v1211 = vpop.f32.mrf.mxu0
    %1212 = vmatprep.mubr.f32.mxu0 0.0
    %1213 = vmatmul.mubr.f32.gmra.mxu0 %v1101
    %v1214 = vpop.f32.mrf.mxu0
    %v1215 = vadd.f32 %v128, %v1214
    %v1216 = vpop.f32.mrf.mxu0
    %1217 = vmatprep.mubr.f32.mxu0 0.0
    %1218 = vmatmul.mubr.f32.gmra.mxu0 %v1103
    %v1219 = vpop.f32.mrf.mxu0
    %v1220 = vadd.f32 %v129, %v1219
    %v1221 = vpop.f32.mrf.mxu0
    %1222 = vmatprep.mubr.f32.mxu0 0.0
    %1223 = vmatmul.mubr.f32.gmra.mxu0 %v1105
    %v1224 = vpop.f32.mrf.mxu0
    %v1225 = vadd.f32 %v130, %v1224
    %v1226 = vpop.f32.mrf.mxu0
    %1227 = vdwg.mxu0
    %v1228 = vsel %vm435, %v1190, -inf
    %1229 = vmax.xlane.f32.xlu0 %v1228
    %v1230 = vpop.xlane.xlu0 %1229
    %v1231 = vsel %vm435, %v1195, -inf
    %1232 = vmax.xlane.f32.xlu0 %v1231
    %v1233 = vpop.xlane.xlu0 %1232
    %v1234 = vsel %vm435, %v1200, -inf
    %1235 = vmax.xlane.f32.xlu0 %v1234
    %v1236 = vpop.xlane.xlu0 %1235
    %v1237 = vsel %vm435, %v1205, -inf
    %1238 = vmax.xlane.f32.xlu0 %v1237
    %v1239 = vpop.xlane.xlu0 %1238
    %v1240 = vsel %vm435, %v1210, -inf
    %1241 = vmax.xlane.f32.xlu0 %v1240
    %v1242 = vpop.xlane.xlu0 %1241
    %v1243 = vsel %vm435, %v1215, -inf
    %1244 = vmax.xlane.f32.xlu0 %v1243
    %v1245 = vpop.xlane.xlu0 %1244
    %v1246 = vsel %vm435, %v1220, -inf
    %1247 = vmax.xlane.f32.xlu0 %v1246
    %v1248 = vpop.xlane.xlu0 %1247
    %v1249 = vsel %vm435, %v1225, -inf
    %1250 = vmax.xlane.f32.xlu0 %v1249
    %v1251 = vpop.xlane.xlu0 %1250
    %v1252 = vsub.f32 %v1190, %v1230
    %v1253 = vsub.f32 %v1195, %v1233
    %v1254 = vsub.f32 %v1200, %v1236
    %v1255 = vsub.f32 %v1205, %v1239
    %v1256 = vsub.f32 %v1210, %v1242
    %v1257 = vsub.f32 %v1215, %v1245
    %v1258 = vsub.f32 %v1220, %v1248
    %v1259 = vsub.f32 %v1225, %v1251
    %v1260 = vmul.f32 %v1252, 1.442695
    %v1261 = vpow.pop %v1260
    %v1262 = vmul.f32 %v1253, 1.442695
    %v1263 = vpow.pop %v1262
    %v1264 = vmul.f32 %v1254, 1.442695
    %v1265 = vpow.pop %v1264
    %v1266 = vmul.f32 %v1255, 1.442695
    %v1267 = vpow.pop %v1266
    %v1268 = vmul.f32 %v1256, 1.442695
    %v1269 = vpow.pop %v1268
    %v1270 = vmul.f32 %v1257, 1.442695
    %v1271 = vpow.pop %v1270
    %v1272 = vmul.f32 %v1258, 1.442695
    %v1273 = vpow.pop %v1272
    %v1274 = vmul.f32 %v1259, 1.442695
    %v1275 = vpow.pop %v1274
    %v1276 = vsel %vm435, %v1261, 0.0
    %1277 = vadd.xlane.f32.xlu0 %v1276
    %v1278 = vpop.xlane.xlu0 %1277
    %v1279 = vsel %vm435, %v1263, 0.0
    %1280 = vadd.xlane.f32.xlu0 %v1279
    %v1281 = vpop.xlane.xlu0 %1280
    %v1282 = vsel %vm435, %v1265, 0.0
    %1283 = vadd.xlane.f32.xlu0 %v1282
    %v1284 = vpop.xlane.xlu0 %1283
    %v1285 = vsel %vm435, %v1267, 0.0
    %1286 = vadd.xlane.f32.xlu0 %v1285
    %v1287 = vpop.xlane.xlu0 %1286
    %v1288 = vsel %vm435, %v1269, 0.0
    %1289 = vadd.xlane.f32.xlu0 %v1288
    %v1290 = vpop.xlane.xlu0 %1289
    %v1291 = vsel %vm435, %v1271, 0.0
    %1292 = vadd.xlane.f32.xlu0 %v1291
    %v1293 = vpop.xlane.xlu0 %1292
    %v1294 = vsel %vm435, %v1273, 0.0
    %1295 = vadd.xlane.f32.xlu0 %v1294
    %v1296 = vpop.xlane.xlu0 %1295
    %v1297 = vsel %vm435, %v1275, 0.0
    %1298 = vadd.xlane.f32.xlu0 %v1297
    %v1299 = vpop.xlane.xlu0 %1298
    %v1300 = vrcp.pop %v1278
    %v1301 = vmul.f32 %v1261, %v1300
    %v1302 = vrcp.pop %v1281
    %v1303 = vmul.f32 %v1263, %v1302
    %v1304 = vrcp.pop %v1284
    %v1305 = vmul.f32 %v1265, %v1304
    %v1306 = vrcp.pop %v1287
    %v1307 = vmul.f32 %v1267, %v1306
    %v1308 = vrcp.pop %v1290
    %v1309 = vmul.f32 %v1269, %v1308
    %v1310 = vrcp.pop %v1293
    %v1311 = vmul.f32 %v1271, %v1310
    %v1312 = vrcp.pop %v1296
    %v1313 = vmul.f32 %v1273, %v1312
    %v1314 = vrcp.pop %v1299
    %v1315 = vmul.f32 %v1275, %v1314
    %1316 = vrot.lane.b32.xlu0 %v1047, 96
    %v1317 = vpop.permute.xlu0 %1316
    %1318 = vrot.lane.b32.xlu0 %v1048, 96
    %v1319 = vpop.permute.xlu0 %1318
    %1320 = vrot.lane.b32.xlu0 %v1080, 96
    %v1321 = vpop.permute.xlu0 %1320
    %1322 = vrot.lane.b32.xlu0 %v1082, 96
    %v1323 = vpop.permute.xlu0 %1322
    %1324 = vrot.lane.b32.xlu0 %v1084, 96
    %v1325 = vpop.permute.xlu0 %1324
    %1326 = vrot.lane.b32.xlu0 %v1086, 96
    %v1327 = vpop.permute.xlu0 %1326
    %1328 = vrot.lane.b32.xlu0 %v1088, 96
    %v1329 = vpop.permute.xlu0 %1328
    %1330 = vrot.lane.b32.xlu0 %v1090, 96
    %v1331 = vpop.permute.xlu0 %1330
    %v1341 = vsel %vm435, %v1301, 0
    %v1344 = vsel %vm435, %v1303, 0
    %v1347 = vsel %vm435, %v1305, 0
    %v1350 = vsel %vm435, %v1307, 0
    %v1353 = vsel %vm435, %v1309, 0
    %v1356 = vsel %vm435, %v1311, 0
    %v1359 = vsel %vm435, %v1313, 0
    %v1362 = vsel %vm435, %v1315, 0
    %1364 = vmatprep.subr.mxu0 0.0
    %1365 = vmatpush1.msra.mxu0 0.0
    %1366 = vmatprep.subr.mxu0 0.0
    %1367 = vmatpush1.msra.mxu0 0.0
    %1368 = vmatprep.subr.mxu0 0.0
    %1369 = vmatpush1.msra.mxu0 0.0
    %1370 = vmatprep.subr.mxu0 0.0
    %1371 = vmatpush1.msra.mxu0 0.0
    %1372 = vmatprep.subr.mxu0 0.0
    %1373 = vmatpush1.msra.mxu0 0.0
    %1374 = vmatprep.subr.mxu0 0.0
    %1375 = vmatpush1.msra.mxu0 0.0
    %1376 = vmatprep.subr.mxu0 0.0
    %1377 = vmatpush1.msra.mxu0 0.0
    %1378 = vmatprep.subr.mxu0 0.0
    %1379 = vmatpush1.msra.mxu0 0.0
    %1380 = vmatprep.subr.mxu0 0.0
    %1381 = vmatpush1.msra.mxu0 %v1331
    %1382 = vmatprep.subr.mxu0 0.0
    %1383 = vmatpush1.msra.mxu0 %v1329
    %1384 = vmatprep.subr.mxu0 0.0
    %1385 = vmatpush1.msra.mxu0 %v1327
    %1386 = vmatprep.subr.mxu0 0.0
    %1387 = vmatpush1.msra.mxu0 %v1325
    %1388 = vmatprep.subr.mxu0 0.0
    %1389 = vmatpush1.msra.mxu0 %v1323
    %1390 = vmatprep.subr.mxu0 0.0
    %1391 = vmatpush1.msra.mxu0 %v1321
    %1392 = vmatprep.subr.mxu0 0.0
    %1393 = vmatpush1.msra.mxu0 %v1319
    %1394 = vmatprep.subr.mxu0 0.0
    %1395 = vmatpush1.msra.mxu0 %v1317
    %1396 = vmatprep.subr.mxu0 0.0
    %1397 = vmatpush2.msra.mxu0 0.0
    %1398 = vmatprep.subr.mxu0 0.0
    %1399 = vmatpush2.msra.mxu0 0.0
    %1400 = vmatprep.subr.mxu0 0.0
    %1401 = vmatpush2.msra.mxu0 0.0
    %1402 = vmatprep.subr.mxu0 0.0
    %1403 = vmatpush2.msra.mxu0 0.0
    %1404 = vmatprep.subr.mxu0 0.0
    %1405 = vmatpush2.msra.mxu0 0.0
    %1406 = vmatprep.subr.mxu0 0.0
    %1407 = vmatpush2.msra.mxu0 0.0
    %1408 = vmatprep.subr.mxu0 0.0
    %1409 = vmatpush2.msra.mxu0 0.0
    %1410 = vmatprep.subr.mxu0 0.0
    %1411 = vmatpush2.msra.mxu0 0.0
    %1412 = vmatprep.subr.mxu0 0.0
    %1413 = vmatpush2.msra.mxu0 0.0
    %1414 = vmatprep.subr.mxu0 0.0
    %1415 = vmatpush2.msra.mxu0 0.0
    %1416 = vmatprep.subr.mxu0 0.0
    %1417 = vmatpush2.msra.mxu0 0.0
    %1418 = vmatprep.subr.mxu0 0.0
    %1419 = vmatpush2.msra.mxu0 0.0
    %1420 = vmatprep.subr.mxu0 0.0
    %1421 = vmatpush2.msra.mxu0 0.0
    %1422 = vmatprep.subr.mxu0 0.0
    %1423 = vmatpush2.msra.mxu0 0.0
    %1424 = vmatprep.subr.mxu0 0.0
    %1425 = vmatpush2.msra.mxu0 0.0
    %1426 = vmatprep.subr.mxu0 0.0
    %1427 = vmatpush2.msra.mxu0 0.0
    %1428 = vmatprep.mubr.f32.mxu0 0.0
    %1429 = vmatmul.mubr.f32.gmra.mxu0 %v1341
    %v1430 = vpop.f32.mrf.mxu0
    %v1431 = vadd.f32 0.0, %v1430
    %v1432 = vpop.f32.mrf.mxu0
    %1433 = vmatprep.mubr.f32.mxu0 0.0
    %1434 = vmatmul.mubr.f32.gmra.mxu0 %v1344
    %v1435 = vpop.f32.mrf.mxu0
    %v1436 = vadd.f32 0.0, %v1435
    %v1437 = vpop.f32.mrf.mxu0
    %1438 = vmatprep.mubr.f32.mxu0 0.0
    %1439 = vmatmul.mubr.f32.gmra.mxu0 %v1347
    %v1440 = vpop.f32.mrf.mxu0
    %v1441 = vadd.f32 0.0, %v1440
    %v1442 = vpop.f32.mrf.mxu0
    %1443 = vmatprep.mubr.f32.mxu0 0.0
    %1444 = vmatmul.mubr.f32.gmra.mxu0 %v1350
    %v1445 = vpop.f32.mrf.mxu0
    %v1446 = vadd.f32 0.0, %v1445
    %v1447 = vpop.f32.mrf.mxu0
    %1448 = vmatprep.mubr.f32.mxu0 0.0
    %1449 = vmatmul.mubr.f32.gmra.mxu0 %v1353
    %v1450 = vpop.f32.mrf.mxu0
    %v1451 = vadd.f32 0.0, %v1450
    %v1452 = vpop.f32.mrf.mxu0
    %1453 = vmatprep.mubr.f32.mxu0 0.0
    %1454 = vmatmul.mubr.f32.gmra.mxu0 %v1356
    %v1455 = vpop.f32.mrf.mxu0
    %v1456 = vadd.f32 0.0, %v1455
    %v1457 = vpop.f32.mrf.mxu0
    %1458 = vmatprep.mubr.f32.mxu0 0.0
    %1459 = vmatmul.mubr.f32.gmra.mxu0 %v1359
    %v1460 = vpop.f32.mrf.mxu0
    %v1461 = vadd.f32 0.0, %v1460
    %v1462 = vpop.f32.mrf.mxu0
    %1463 = vmatprep.mubr.f32.mxu0 0.0
    %1464 = vmatmul.mubr.f32.gmra.mxu0 %v1362
    %v1465 = vpop.f32.mrf.mxu0
    %v1466 = vadd.f32 0.0, %v1465
    %v1467 = vpop.f32.mrf.mxu0
    %1468 = vdwg.mxu0
    %1471 = vrot.lane.b32.xlu0 %v1441, 8
    %v1472 = vpop.permute.xlu0 %1471
    %1473 = vrot.lane.b32.xlu0 %v1446, 8
    %v1474 = vpop.permute.xlu0 %1473
    %1479 = vrot.lane.b32.xlu0 %v1451, 16
    %v1480 = vpop.permute.xlu0 %1479
    %1481 = vrot.lane.b32.xlu0 %v1456, 16
    %v1482 = vpop.permute.xlu0 %1481
    %1487 = vrot.lane.b32.xlu0 %v1461, 24
    %v1488 = vpop.permute.xlu0 %1487
    %1489 = vrot.lane.b32.xlu0 %v1466, 24
    %v1490 = vpop.permute.xlu0 %1489
    %v1493 = vsel %vm297, %v1431, %v1472
    %v1494 = vsel %vm297, %v1436, %v1474
    %v1495 = vsel %vm703, %v1493, %v1480
    %v1496 = vsel %vm703, %v1494, %v1482
    %v1497 = vsel %vm706, %v1495, %v1488
    %v1498 = vsel %vm706, %v1496, %v1490
    %v1499 = vlaneseq
    %v1500 = vshrl.u32 %v1499, 7
    %v1501 = vsub.s32 7, %v1500
    %v1502 = vrot.slane %v93, %v1501
    %1503 = vrot.lane.b32.xlu0 %v78, 32
    %v1504 = vpop.permute.xlu0 %1503
    %1505 = vrot.lane.b32.xlu0 %v82, 32
    %v1506 = vpop.permute.xlu0 %1505
    %1507 = vrot.lane.b32.xlu0 %v86, 32
    %v1508 = vpop.permute.xlu0 %1507
    %1509 = vrot.lane.b32.xlu0 %v90, 32
    %v1510 = vpop.permute.xlu0 %1509
    %v1516 = vsel %vm131, %v1497, 0
    %v1519 = vsel %vm131, %v1498, 0
    %1521 = vmatprep.subr.mxu0 0.0
    %1522 = vmatpush1.msra.mxu0 0.0
    %1523 = vmatprep.subr.mxu0 0.0
    %1524 = vmatpush1.msra.mxu0 0.0
    %1525 = vmatprep.subr.mxu0 0.0
    %1526 = vmatpush1.msra.mxu0 0.0
    %1527 = vmatprep.subr.mxu0 0.0
    %1528 = vmatpush1.msra.mxu0 0.0
    %1529 = vmatprep.subr.mxu0 0.0
    %1530 = vmatpush1.msra.mxu0 0.0
    %1531 = vmatprep.subr.mxu0 0.0
    %1532 = vmatpush1.msra.mxu0 0.0
    %1533 = vmatprep.subr.mxu0 0.0
    %1534 = vmatpush1.msra.mxu0 0.0
    %1535 = vmatprep.subr.mxu0 0.0
    %1536 = vmatpush1.msra.mxu0 0.0
    %1537 = vmatprep.subr.mxu0 0.0
    %1538 = vmatpush1.msra.mxu0 0.0
    %1539 = vmatprep.subr.mxu0 0.0
    %1540 = vmatpush1.msra.mxu0 0.0
    %1541 = vmatprep.subr.mxu0 0.0
    %1542 = vmatpush1.msra.mxu0 0.0
    %1543 = vmatprep.subr.mxu0 0.0
    %1544 = vmatpush1.msra.mxu0 0.0
    %1545 = vmatprep.subr.mxu0 0.0
    %1546 = vmatpush1.msra.mxu0 %v1510
    %1547 = vmatprep.subr.mxu0 0.0
    %1548 = vmatpush1.msra.mxu0 %v1508
    %1549 = vmatprep.subr.mxu0 0.0
    %1550 = vmatpush1.msra.mxu0 %v1506
    %1551 = vmatprep.subr.mxu0 0.0
    %1552 = vmatpush1.msra.mxu0 %v1504
    %1553 = vmatprep.subr.mxu0 0.0
    %1554 = vmatpush2.msra.mxu0 0.0
    %1555 = vmatprep.subr.mxu0 0.0
    %1556 = vmatpush2.msra.mxu0 0.0
    %1557 = vmatprep.subr.mxu0 0.0
    %1558 = vmatpush2.msra.mxu0 0.0
    %1559 = vmatprep.subr.mxu0 0.0
    %1560 = vmatpush2.msra.mxu0 0.0
    %1561 = vmatprep.subr.mxu0 0.0
    %1562 = vmatpush2.msra.mxu0 0.0
    %1563 = vmatprep.subr.mxu0 0.0
    %1564 = vmatpush2.msra.mxu0 0.0
    %1565 = vmatprep.subr.mxu0 0.0
    %1566 = vmatpush2.msra.mxu0 0.0
    %1567 = vmatprep.subr.mxu0 0.0
    %1568 = vmatpush2.msra.mxu0 0.0
    %1569 = vmatprep.subr.mxu0 0.0
    %1570 = vmatpush2.msra.mxu0 0.0
    %1571 = vmatprep.subr.mxu0 0.0
    %1572 = vmatpush2.msra.mxu0 0.0
    %1573 = vmatprep.subr.mxu0 0.0
    %1574 = vmatpush2.msra.mxu0 0.0
    %1575 = vmatprep.subr.mxu0 0.0
    %1576 = vmatpush2.msra.mxu0 0.0
    %1577 = vmatprep.subr.mxu0 0.0
    %1578 = vmatpush2.msra.mxu0 0.0
    %1579 = vmatprep.subr.mxu0 0.0
    %1580 = vmatpush2.msra.mxu0 0.0
    %1581 = vmatprep.subr.mxu0 0.0
    %1582 = vmatpush2.msra.mxu0 0.0
    %1583 = vmatprep.subr.mxu0 0.0
    %1584 = vmatpush2.msra.mxu0 0.0
    %1585 = vmatprep.mubr.f32.mxu0 0.0
    %1586 = vmatmul.mubr.f32.gmra.mxu0 %v1516
    %v1587 = vpop.f32.mrf.mxu0
    %v1588 = vadd.f32 %v1502, %v1587
    %v1589 = vpop.f32.mrf.mxu0
    %1590 = vmatprep.mubr.f32.mxu0 0.0
    %1591 = vmatmul.mubr.f32.gmra.mxu0 %v1519
    %v1592 = vpop.f32.mrf.mxu0
    %v1593 = vadd.f32 %v1502, %v1592
    %v1594 = vpop.f32.mrf.mxu0
    %1595 = vdwg.mxu0
    %v1596 = vadd.f32 %v849, %v1588
    %v1597 = vadd.f32 %v850, %v1593
    %v1598 = vsel %vm131, %v1596, 0.0
    %1599 = vadd.xlane.f32.xlu0 %v1598
    %v1600 = vpop.xlane.xlu0 %1599
    %v1601 = vsel %vm131, %v1597, 0.0
    %1602 = vadd.xlane.f32.xlu0 %v1601
    %v1603 = vpop.xlane.xlu0 %1602
    %v1604 = vmul.f32 %v1600, %v818
    %v1605 = vmul.f32 %v1603, %v818
    %v1606 = vsub.f32 %v1596, %v1604
    %v1607 = vsub.f32 %v1597, %v1605
    %v1608 = vmul.f32 %v1606, %v1606
    %v1609 = vmul.f32 %v1607, %v1607
    %v1610 = vsel %vm131, %v1608, 0.0
    %1611 = vadd.xlane.f32.xlu0 %v1610
    %v1612 = vpop.xlane.xlu0 %1611
    %v1613 = vsel %vm131, %v1609, 0.0
    %1614 = vadd.xlane.f32.xlu0 %v1613
    %v1615 = vpop.xlane.xlu0 %1614
    %v1616 = vmul.f32 %v1612, %v818
    %v1617 = vmul.f32 %v1615, %v818
    %v1618 = vadd.f32 %v1616, 1e-05
    %v1619 = vadd.f32 %v1617, 1e-05
    %v1620 = vrsqrt.pop %v1618
    %v1621 = vrsqrt.pop %v1619
    %v1622 = vmul.f32 %v1606, %v1620
    %v1623 = vmul.f32 %v1607, %v1621
    %v1624 = vlaneseq
    %v1625 = vshrl.u32 %v1624, 7
    %v1626 = vsub.s32 3, %v1625
    %v1627 = vrot.slane %v94, %v1626
    %v1628 = vmul.f32 %v1622, %v1627
    %v1629 = vmul.f32 %v1623, %v1627
    %v1630 = vlaneseq
    %v1631 = vshrl.u32 %v1630, 7
    %v1632 = vsub.s32 4, %v1631
    %v1633 = vrot.slane %v94, %v1632
    %v1634 = vadd.f32 %v1628, %v1633
    %v1635 = vadd.f32 %v1629, %v1633
    %v1636 = vlaneseq
    %v1637 = vshrl.u32 %v1636, 7
    %v1638 = vsub.s32 7, %v1637
    %v1639 = vrot.slane %v94, %v1638
    %v1641 = vsel %vm131, %v1634, 0
    %v1644 = vsel %vm131, %v1635, 0
    %1646 = vmatprep.subr.mxu0 0.0
    %1647 = vmatpush1.msra.mxu0 0.0
    %1648 = vmatprep.subr.mxu0 0.0
    %1649 = vmatpush1.msra.mxu0 0.0
    %1650 = vmatprep.subr.mxu0 0.0
    %1651 = vmatpush1.msra.mxu0 0.0
    %1652 = vmatprep.subr.mxu0 0.0
    %1653 = vmatpush1.msra.mxu0 0.0
    %1654 = vmatprep.subr.mxu0 0.0
    %1655 = vmatpush1.msra.mxu0 0.0
    %1656 = vmatprep.subr.mxu0 0.0
    %1657 = vmatpush1.msra.mxu0 0.0
    %1658 = vmatprep.subr.mxu0 0.0
    %1659 = vmatpush1.msra.mxu0 0.0
    %1660 = vmatprep.subr.mxu0 0.0
    %1661 = vmatpush1.msra.mxu0 0.0
    %1662 = vmatprep.subr.mxu0 0.0
    %1663 = vmatpush1.msra.mxu0 0.0
    %1664 = vmatprep.subr.mxu0 0.0
    %1665 = vmatpush1.msra.mxu0 0.0
    %1666 = vmatprep.subr.mxu0 0.0
    %1667 = vmatpush1.msra.mxu0 0.0
    %1668 = vmatprep.subr.mxu0 0.0
    %1669 = vmatpush1.msra.mxu0 0.0
    %1670 = vmatprep.subr.mxu0 0.0
    %1671 = vmatpush1.msra.mxu0 %v91
    %1672 = vmatprep.subr.mxu0 0.0
    %1673 = vmatpush1.msra.mxu0 %v87
    %1674 = vmatprep.subr.mxu0 0.0
    %1675 = vmatpush1.msra.mxu0 %v83
    %1676 = vmatprep.subr.mxu0 0.0
    %1677 = vmatpush1.msra.mxu0 %v79
    %1678 = vmatprep.subr.mxu0 0.0
    %1679 = vmatpush2.msra.mxu0 0.0
    %1680 = vmatprep.subr.mxu0 0.0
    %1681 = vmatpush2.msra.mxu0 0.0
    %1682 = vmatprep.subr.mxu0 0.0
    %1683 = vmatpush2.msra.mxu0 0.0
    %1684 = vmatprep.subr.mxu0 0.0
    %1685 = vmatpush2.msra.mxu0 0.0
    %1686 = vmatprep.subr.mxu0 0.0
    %1687 = vmatpush2.msra.mxu0 0.0
    %1688 = vmatprep.subr.mxu0 0.0
    %1689 = vmatpush2.msra.mxu0 0.0
    %1690 = vmatprep.subr.mxu0 0.0
    %1691 = vmatpush2.msra.mxu0 0.0
    %1692 = vmatprep.subr.mxu0 0.0
    %1693 = vmatpush2.msra.mxu0 0.0
    %1694 = vmatprep.subr.mxu0 0.0
    %1695 = vmatpush2.msra.mxu0 0.0
    %1696 = vmatprep.subr.mxu0 0.0
    %1697 = vmatpush2.msra.mxu0 0.0
    %1698 = vmatprep.subr.mxu0 0.0
    %1699 = vmatpush2.msra.mxu0 0.0
    %1700 = vmatprep.subr.mxu0 0.0
    %1701 = vmatpush2.msra.mxu0 0.0
    %1702 = vmatprep.subr.mxu0 0.0
    %1703 = vmatpush2.msra.mxu0 0.0
    %1704 = vmatprep.subr.mxu0 0.0
    %1705 = vmatpush2.msra.mxu0 0.0
    %1706 = vmatprep.subr.mxu0 0.0
    %1707 = vmatpush2.msra.mxu0 0.0
    %1708 = vmatprep.subr.mxu0 0.0
    %1709 = vmatpush2.msra.mxu0 0.0
    %1710 = vmatprep.mubr.f32.mxu0 0.0
    %1711 = vmatmul.mubr.f32.gmra.mxu0 %v1641
    %v1712 = vpop.f32.mrf.mxu0
    %v1713 = vadd.f32 %v1639, %v1712
    %v1714 = vpop.f32.mrf.mxu0
    %1715 = vmatprep.mubr.f32.mxu0 0.0
    %1716 = vmatmul.mubr.f32.gmra.mxu0 %v1644
    %v1717 = vpop.f32.mrf.mxu0
    %v1718 = vadd.f32 %v1639, %v1717
    %v1719 = vpop.f32.mrf.mxu0
    %1720 = vdwg.mxu0
    %v1721 = vmax.f32 %v1713, 0.0
    %v1722 = vmax.f32 %v1718, 0.0
    %v1723 = vlaneseq
    %v1724 = vshrl.u32 %v1723, 7
    %v1725 = vsub.s32 0, %v1724
    %v1726 = vrot.slane %v94, %v1725
    %1727 = vmatprep.subr.mxu0 0.0
    %1728 = vmatpush1.xpose.msra.mxu0 0.0
    %1729 = vmatprep.subr.mxu0 0.0
    %1730 = vmatpush1.xpose.msra.mxu0 0.0
    %1731 = vmatprep.subr.mxu0 0.0
    %1732 = vmatpush1.xpose.msra.mxu0 0.0
    %1733 = vmatprep.subr.mxu0 0.0
    %1734 = vmatpush1.xpose.msra.mxu0 0.0
    %1735 = vmatprep.subr.mxu0 0.0
    %1736 = vmatpush1.xpose.msra.mxu0 0.0
    %1737 = vmatprep.subr.mxu0 0.0
    %1738 = vmatpush1.xpose.msra.mxu0 0.0
    %1739 = vmatprep.subr.mxu0 0.0
    %1740 = vmatpush1.xpose.msra.mxu0 0.0
    %1741 = vmatprep.subr.mxu0 0.0
    %1742 = vmatpush1.xpose.msra.mxu0 0.0
    %1743 = vmatprep.subr.mxu0 0.0
    %1744 = vmatpush1.xpose.msra.mxu0 0.0
    %1745 = vmatprep.subr.mxu0 0.0
    %1746 = vmatpush1.xpose.msra.mxu0 0.0
    %1747 = vmatprep.subr.mxu0 0.0
    %1748 = vmatpush1.xpose.msra.mxu0 0.0
    %1749 = vmatprep.subr.mxu0 0.0
    %1750 = vmatpush1.xpose.msra.mxu0 0.0
    %1751 = vmatprep.subr.mxu0 0.0
    %1752 = vmatpush1.xpose.msra.mxu0 %v92
    %1753 = vmatprep.subr.mxu0 0.0
    %1754 = vmatpush1.xpose.msra.mxu0 %v88
    %1755 = vmatprep.subr.mxu0 0.0
    %1756 = vmatpush1.xpose.msra.mxu0 %v84
    %1757 = vmatprep.subr.mxu0 0.0
    %1758 = vmatpush1.xpose.msra.mxu0 %v80
    %1759 = vmatprep.subr.mxu0 0.0
    %1760 = vmatpush2.xpose.msra.mxu0 0.0
    %1761 = vmatprep.subr.mxu0 0.0
    %1762 = vmatpush2.xpose.msra.mxu0 0.0
    %1763 = vmatprep.subr.mxu0 0.0
    %1764 = vmatpush2.xpose.msra.mxu0 0.0
    %1765 = vmatprep.subr.mxu0 0.0
    %1766 = vmatpush2.xpose.msra.mxu0 0.0
    %1767 = vmatprep.subr.mxu0 0.0
    %1768 = vmatpush2.xpose.msra.mxu0 0.0
    %1769 = vmatprep.subr.mxu0 0.0
    %1770 = vmatpush2.xpose.msra.mxu0 0.0
    %1771 = vmatprep.subr.mxu0 0.0
    %1772 = vmatpush2.xpose.msra.mxu0 0.0
    %1773 = vmatprep.subr.mxu0 0.0
    %1774 = vmatpush2.xpose.msra.mxu0 0.0
    %1775 = vmatprep.subr.mxu0 0.0
    %1776 = vmatpush2.xpose.msra.mxu0 0.0
    %1777 = vmatprep.subr.mxu0 0.0
    %1778 = vmatpush2.xpose.msra.mxu0 0.0
    %1779 = vmatprep.subr.mxu0 0.0
    %1780 = vmatpush2.xpose.msra.mxu0 0.0
    %1781 = vmatprep.subr.mxu0 0.0
    %1782 = vmatpush2.xpose.msra.mxu0 0.0
    %1783 = vmatprep.subr.mxu0 0.0
    %1784 = vmatpush2.xpose.msra.mxu0 0.0
    %1785 = vmatprep.subr.mxu0 0.0
    %1786 = vmatpush2.xpose.msra.mxu0 0.0
    %1787 = vmatprep.subr.mxu0 0.0
    %1788 = vmatpush2.xpose.msra.mxu0 0.0
    %1789 = vmatprep.subr.mxu0 0.0
    %1790 = vmatpush2.xpose.msra.mxu0 0.0
    %1791 = vmatprep.mubr.f32.mxu0 0.0
    %1792 = vmatmul.mubr.f32.gmra.mxu0 %v1721
    %v1793 = vpop.f32.mrf.mxu0
    %v1794 = vadd.f32 %v1726, %v1793
    %v1795 = vpop.f32.mrf.mxu0
    %1796 = vmatprep.mubr.f32.mxu0 0.0
    %1797 = vmatmul.mubr.f32.gmra.mxu0 %v1722
    %v1798 = vpop.f32.mrf.mxu0
    %v1799 = vadd.f32 %v1726, %v1798
    %v1800 = vpop.f32.mrf.mxu0
    %1801 = vdwg.mxu0
    %v1802 = vadd.f32 %v1634, %v1794
    %v1803 = vadd.f32 %v1635, %v1799
    %v1804 = vsel %vm131, %v1802, 0.0
    %1805 = vadd.xlane.f32.xlu0 %v1804
    %v1806 = vpop.xlane.xlu0 %1805
    %v1807 = vsel %vm131, %v1803, 0.0
    %1808 = vadd.xlane.f32.xlu0 %v1807
    %v1809 = vpop.xlane.xlu0 %1808
    %v1810 = vmul.f32 %v1806, %v818
    %v1811 = vmul.f32 %v1809, %v818
    %v1812 = vsub.f32 %v1802, %v1810
    %v1813 = vsub.f32 %v1803, %v1811
    %v1814 = vmul.f32 %v1812, %v1812
    %v1815 = vmul.f32 %v1813, %v1813
    %v1816 = vsel %vm131, %v1814, 0.0
    %1817 = vadd.xlane.f32.xlu0 %v1816
    %v1818 = vpop.xlane.xlu0 %1817
    %v1819 = vsel %vm131, %v1815, 0.0
    %1820 = vadd.xlane.f32.xlu0 %v1819
    %v1821 = vpop.xlane.xlu0 %1820
    %v1822 = vmul.f32 %v1818, %v818
    %v1823 = vmul.f32 %v1821, %v818
    %v1824 = vadd.f32 %v1822, 1e-05
    %v1825 = vadd.f32 %v1823, 1e-05
    %v1826 = vrsqrt.pop %v1824
    %v1827 = vrsqrt.pop %v1825
    %v1828 = vmul.f32 %v1812, %v1826
    %v1829 = vmul.f32 %v1813, %v1827
    %v1830 = vlaneseq
    %v1831 = vshrl.u32 %v1830, 7
    %v1832 = vsub.s32 5, %v1831
    %v1833 = vrot.slane %v94, %v1832
    %v1834 = vmul.f32 %v1828, %v1833
    %v1835 = vmul.f32 %v1829, %v1833
    %v1836 = vlaneseq
    %v1837 = vshrl.u32 %v1836, 7
    %v1838 = vsub.s32 6, %v1837
    %v1839 = vrot.slane %v94, %v1838
    %v1840 = vadd.f32 %v1834, %v1839
    %v1841 = vadd.f32 %v1835, %v1839
    %1842 = vst.msk [vmem:[#allocation10] sm:$0xff] %vm131, %v1840
    %1843 = vst.msk [vmem:[#allocation10 + $0x8] sm:$0xff] %vm131, %v1841
    // Predicated region
    $region34: #{tpu_custom_call.1} parent=1 // pred_check
      _
    $region35: #{tpu_custom_call.1} parent=1 // pred_check_branch
      %1845 = sbr.rel (0) target = $region37
    $region36: #{tpu_custom_call.1} parent=1 // pred_region
      %s1847 = ssub.s32 256, 256
      %1848 = vsyncadd [#allocation4], %s1847
      %s1849 = sshll.u32 [#allocation10], 4
      %s1850 = int_to_ptr.vmem [resolvable:$true] %s1849
      %1855 = dma.vmem_to_hbm [thread:$0]  %s1850, 256, %s4, [#allocation4], 128, 128, 8
    $region37: #{tpu_custom_call.1} parent=1 // pred_fallthru
      _
    // Predicated region
    $region38: #{tpu_custom_call.1} parent=1 // pred_check
      _
    $region39: #{tpu_custom_call.1} parent=1 // pred_check_branch
      %1857 = sbr.rel (0) target = $region41
    $region40: #{tpu_custom_call.1} parent=1 // pred_region
      %1858 = dma.done [#allocation4], 256
    $region41: #{tpu_custom_call.1} parent=1 // pred_fallthru
      _
    %1859 = vsyncpa [#allocation3], 1
    %1860 = vsyncpa [#allocation6], 1
    %1861 = vsyncpa [#allocation9], 1
    %1862 = vsyncpa [#allocation4], 1

</llo_original>
